<compile_context>
chip_gen: v7x
topology: tpu7x:2x2x1
jax: 0.10.0
libtpu: 0.0.40
codegen_flags: <defaults>
</compile_context>

<pallas_src>
import functools
import math

import jax
import jax.numpy as jnp
from jax.experimental import pallas as pl
from jax.experimental.pallas import tpu as pltpu

IMG_SIZE = 16
NUM_CLASSES = 3
# anchors in "pixels" of IMG_SIZE (config units), 6 anchors / 2 yolo heads
ANCHORS = [(2.0, 2.0), (4.0, 4.0), (6.0, 6.0),
           (8.0, 8.0), (10.0, 10.0), (12.0, 12.0)]

# Synthetic mini config (stands in for parse_model_configuration(config_path)).
BLOCKS = [
    {'type': 'convolutional', 'batch_normalize': 1, 'filters': 8,  'size': 3, 'stride': 1, 'pad': 1, 'activation': 'leaky'},   # 0: 16x16, 8ch
    {'type': 'maxpool',       'size': 2, 'stride': 2},                                                                         # 1: 8x8,  8ch
    {'type': 'convolutional', 'batch_normalize': 1, 'filters': 16, 'size': 3, 'stride': 1, 'pad': 1, 'activation': 'leaky'},   # 2: 8x8, 16ch
    {'type': 'convolutional', 'batch_normalize': 1, 'filters': 8,  'size': 1, 'stride': 1, 'pad': 0, 'activation': 'leaky'},   # 3
    {'type': 'convolutional', 'batch_normalize': 1, 'filters': 16, 'size': 3, 'stride': 1, 'pad': 1, 'activation': 'leaky'},   # 4
    {'type': 'shortcut', 'from': '-3', 'activation': 'linear'},                                                                # 5: 8x8, 16ch
    {'type': 'convolutional', 'batch_normalize': 0, 'filters': 24, 'size': 1, 'stride': 1, 'pad': 0, 'activation': 'linear'},  # 6: yolo head
    {'type': 'yolo', 'mask': '3,4,5', 'classes': NUM_CLASSES},                                                                 # 7: grid 8
    {'type': 'route', 'layers': '-3'},                                                                                         # 8: 8x8, 16ch
    {'type': 'convolutional', 'batch_normalize': 1, 'filters': 8,  'size': 1, 'stride': 1, 'pad': 0, 'activation': 'leaky'},   # 9
    {'type': 'upsample', 'stride': 2},                                                                                         # 10: 16x16, 8ch
    {'type': 'route', 'layers': '-1,0'},                                                                                       # 11: 16x16, 16ch
    {'type': 'convolutional', 'batch_normalize': 1, 'filters': 16, 'size': 3, 'stride': 1, 'pad': 1, 'activation': 'leaky'},   # 12
    {'type': 'convolutional', 'batch_normalize': 0, 'filters': 24, 'size': 1, 'stride': 1, 'pad': 0, 'activation': 'linear'},  # 13: yolo head
    {'type': 'yolo', 'mask': '0,1,2', 'classes': NUM_CLASSES},                                                                 # 14: grid 16
]

_VMEM = pl.BlockSpec(memory_space=pltpu.MemorySpace.VMEM)


# ----------------------------- Pallas kernels -----------------------------

def _yolo_epilogue(y, awh, D, G, stride):
    """YOLO transform on (A*D, B*G*G) logits: sigmoid(x,y)+grid, exp(w,h)*anchor,
    sigmoid(conf/cls).  Grid offsets derived from an in-kernel iota over the lane axis
    (no dense auxiliary arrays).  All divisors are small; float mod is exact."""
    colf = jax.lax.broadcasted_iota(jnp.int32, y.shape, 1).astype(jnp.float32)
    rowf = jax.lax.broadcasted_iota(jnp.int32, y.shape, 0).astype(jnp.float32)
    gg = float(G * G)
    cell = colf - jnp.floor(colf / gg + 1e-4) * gg            # cell index within one image
    gy = jnp.floor(cell / float(G) + 1e-4)
    gx = cell - gy * float(G)
    d = rowf - jnp.floor(rowf / float(D) + 1e-4) * float(D)   # field index within one anchor
    sig = jax.nn.sigmoid(y)
    xy = (sig + jnp.where(d < 0.5, gx, gy)) * stride
    is_wh = (d > 1.5) & (d < 3.5)
    wh = jnp.exp(jnp.where(is_wh, y, 0.0)) * awh * stride     # exp guarded on discarded rows
    return jnp.where(d < 1.5, xy, jnp.where(d < 3.5, wh, sig))


def conv_fused_kernel(w_ref, p_ref, scale_ref, shift_ref, *rest,
                      leaky, has_res, yolo):
    """(Cout, K) @ (K, M) matmul with fused BN affine + LeakyReLU(0.1), optional
    residual add (Darknet shortcut) and optional YOLO head transform.
    Output (Cout, M): the 128-multiple M dimension sits on lanes (dense stores)."""
    o_ref = rest[-1]
    idx = 0
    res_ref = awh_ref = None
    if has_res:
        res_ref = rest[idx]; idx += 1
    if yolo is not None:
        awh_ref = rest[idx]; idx += 1

    y = jnp.dot(w_ref[...], p_ref[...], preferred_element_type=jnp.float32)
    y = y * scale_ref[...] + shift_ref[...]      # BN affine / conv bias (f32 epilogue)
    if leaky:
        y = jnp.where(y > 0, y, 0.1 * y)
    if has_res:
        y = y + res_ref[...]
    if yolo is not None:
        D, G, stride = yolo
        y = _yolo_epilogue(y, awh_ref[...], D, G, stride)
    o_ref[...] = y


def max4_kernel(a_ref, b_ref, c_ref, d_ref, o_ref):
    """Elementwise max over the 4 elements of a 2x2 pooling window (lane-dense)."""
    o_ref[...] = jnp.maximum(jnp.maximum(a_ref[...], b_ref[...]),
                             jnp.maximum(c_ref[...], d_ref[...]))


def add_kernel(a_ref, b_ref, o_ref):
    o_ref[...] = a_ref[...] + b_ref[...]


def yolo_kernel(p_ref, awh_ref, o_ref, *, D, G, stride):
    """Standalone YOLO transform (only used if a yolo block does not follow a conv)."""
    o_ref[...] = _yolo_epilogue(p_ref[...], awh_ref[...], D, G, stride)


# ------------------------------ layer wrappers -----------------------------

def conv_layer(x_cm, H, W, w, scale, shift, k, s, pad, leaky,
               res_cm=None, yolo=None, yolo_awh=None):
    """x_cm: (Cin, B*H*W) channel-major activations; w: (Cout, Cin, k, k) PyTorch layout.
    Returns ((Cout, B*Ho*Wo), Ho, Wo).  BN fused via scale/shift; optional fused
    residual add and YOLO transform."""
    Cin, M = x_cm.shape
    B = M // (H * W)
    Cout = w.shape[0]
    if k == 1 and pad == 0 and s == 1:
        patches, Ho, Wo = x_cm, H, W             # 1x1 conv: activations ARE the patches
    else:
        xs = x_cm.reshape(Cin, B, H, W)
        xp = jnp.pad(xs, ((0, 0), (0, 0), (pad, pad), (pad, pad)))
        Ho = (H + 2 * pad - k) // s + 1
        Wo = (W + 2 * pad - k) // s + 1
        taps = [xp[:, :, i:i + Ho * s:s, j:j + Wo * s:s]
                for i in range(k) for j in range(k)]
        # TODO(synk): accumulate the k*k taps inside the kernel (grid over taps into a
        # VMEM accumulator) instead of materializing the (k*k*Cin, M) patch matrix in HBM.
        patches = jnp.stack(taps, axis=0).reshape(k * k * Cin, B * Ho * Wo)
    K, Mo = patches.shape
    wmat = jnp.transpose(w, (0, 2, 3, 1)).reshape(Cout, K)    # K ordered (kh, kw, Cin)

    inputs = [wmat.astype(jnp.bfloat16), patches.astype(jnp.bfloat16),
              scale.reshape(Cout, 1), shift.reshape(Cout, 1)]
    if res_cm is not None:
        inputs.append(res_cm)
    if yolo is not None:
        inputs.append(yolo_awh)

    out = pl.pallas_call(
        functools.partial(conv_fused_kernel, leaky=leaky,
                          has_res=res_cm is not None, yolo=yolo),
        out_shape=jax.ShapeDtypeStruct((Cout, Mo), jnp.float32),
        in_specs=[_VMEM] * len(inputs),
        out_specs=_VMEM,
    )(*inputs)
    return out, Ho, Wo


def maxpool2x2(x_cm, H, W):
    """2x2/stride-2 max pool in the lane-dense (C, B*H*W) layout."""
    C, M = x_cm.shape
    B = M // (H * W)
    xs = x_cm.reshape(C, B, H, W)
    Ho, Wo = H // 2, W // 2
    Mo = B * Ho * Wo
    a = xs[:, :, 0::2, 0::2].reshape(C, Mo)
    b = xs[:, :, 0::2, 1::2].reshape(C, Mo)
    c = xs[:, :, 1::2, 0::2].reshape(C, Mo)
    d = xs[:, :, 1::2, 1::2].reshape(C, Mo)
    # TODO(synk): fuse the 2x2 pool into the preceding conv's epilogue so the window max
    # happens on the VMEM-resident conv output instead of via 4 strided-slice HLOs.
    out = pl.pallas_call(
        max4_kernel,
        out_shape=jax.ShapeDtypeStruct((C, Mo), jnp.float32),
        in_specs=[_VMEM] * 4, out_specs=_VMEM,
    )(a, b, c, d)
    return out, Ho, Wo


def yolo_awh_column(anchors, D, stride):
    """(A*D, 1) per-row anchor column: aw/stride on d==2 rows, ah/stride on d==3, else 1."""
    col = []
    for (aw, ah) in anchors:
        v = [1.0] * D
        v[2] = aw / stride
        v[3] = ah / stride
        col.extend(v)
    return jnp.asarray(col, jnp.float32).reshape(len(anchors) * D, 1)


def head_to_detections(x_cm, B, A, D, G):
    """(A*D, B*G*G) -> (B, A*G*G, D), matching the PyTorch YOLO layer output ordering."""
    return x_cm.reshape(A, D, B, G * G).transpose(2, 0, 3, 1).reshape(B, A * G * G, D)


# ------------------------------ model glue ---------------------------------

def init_params(blocks, in_channels, key):
    """Deterministic synthetic parameters (stands in for load_weights)."""
    params = []
    prev_channels = []
    out_ch = in_channels
    for b in blocks:
        p = None
        if b['type'] == 'convolutional':
            cin, cout, k = out_ch, int(b['filters']), int(b['size'])
            key, k1, k2, k3 = jax.random.split(key, 4)
            w = jax.random.normal(k1, (cout, cin, k, k), jnp.float32) * (0.3 / math.sqrt(cin * k * k))
            if int(b.get('batch_normalize', 0)):
                gamma = 1.0 + 0.05 * jax.random.normal(k2, (cout,), jnp.float32)
                beta = 0.05 * jax.random.normal(k3, (cout,), jnp.float32)
                mean = jnp.zeros((cout,), jnp.float32)
                var = jnp.ones((cout,), jnp.float32)
                scale = gamma / jnp.sqrt(var + 1e-5)
                shift = beta - mean * scale
            else:
                scale = jnp.ones((cout,), jnp.float32)
                shift = 0.05 * jax.random.normal(k2, (cout,), jnp.float32)  # conv bias
            p = {'w': w, 'scale': scale, 'shift': shift}
            out_ch = cout
        elif b['type'] == 'route':
            idxs = [int(v) for v in b['layers'].split(',')]
            out_ch = sum(prev_channels[j] for j in idxs)
        elif b['type'] == 'shortcut':
            out_ch = prev_channels[-1]
        params.append(p)
        prev_channels.append(out_ch)
    return params


def darknet_forward(x_nchw, blocks, params):
    B, C0, H0, W0 = x_nchw.shape
    # NCHW -> channel-major lane-dense (C, B*H*W); M ordering is (b, h, w) throughout.
    x = jnp.transpose(x_nchw, (1, 0, 2, 3)).reshape(C0, B * H0 * W0).astype(jnp.float32)
    H, W = H0, W0
    detections = []
    layer_outputs = []   # per-block (feature_map_cm | None, H, W)
    n = len(blocks)
    i = 0
    while i < n:
        blk = blocks[i]
        t = blk['type']
        if t == 'convolutional':
            prm = params[i]
            k, s = int(blk['size']), int(blk['stride'])
            pad = (k - 1) // 2 if int(blk['pad']) else 0
            leaky = blk['activation'] == 'leaky'
            nxt = blocks[i + 1] if i + 1 < n else None

            res_cm = None
            yolo = None
            yolo_awh = None
            if nxt is not None and nxt['type'] == 'shortcut':
                # Fuse the shortcut add into this conv's epilogue.
                j = int(nxt['from'])
                src = layer_outputs[(i + 1) + j] if j < 0 else layer_outputs[j]
                res_cm = src[0]
            elif nxt is not None and nxt['type'] == 'yolo':
                # Fuse the YOLO head transform into this conv's epilogue.
                mask = [int(v) for v in nxt['mask'].split(',')]
                anchors = [ANCHORS[m] for m in mask]
                D = 5 + int(nxt['classes'])
                G = (H + 2 * pad - k) // s + 1
                stride_ = IMG_SIZE / G
                yolo = (D, G, float(stride_))
                yolo_awh = yolo_awh_column(anchors, D, stride_)

            x, H, W = conv_layer(x, H, W, prm['w'], prm['scale'], prm['shift'],
                                 k, s, pad, leaky,
                                 res_cm=res_cm, yolo=yolo, yolo_awh=yolo_awh)

            if yolo is not None:
                D, G, _ = yolo
                A = x.shape[0] // D
                detections.append(head_to_detections(x, B, A, D, G))
                # Neither the head conv nor the yolo block is ever routed to in this
                # config; store placeholders for both fused positions.
                layer_outputs.append((None, H, W))
                layer_outputs.append((None, H, W))
                i += 2
                continue
            if res_cm is not None:
                # Fused conv+shortcut: the summed map stands in for both layer slots.
                layer_outputs.append((x, H, W))
                layer_outputs.append((x, H, W))
                i += 2
                continue
            layer_outputs.append((x, H, W))
        elif t == 'maxpool':
            x, H, W = maxpool2x2(x, H, W)
            layer_outputs.append((x, H, W))
        elif t == 'upsample':
            st = int(blk['stride'])
            C, M = x.shape
            Bsz = M // (H * W)
            xs = x.reshape(C, Bsz, H, W)
            xs = jnp.repeat(jnp.repeat(xs, st, axis=2), st, axis=3)  # nearest-neighbor
            H, W = H * st, W * st
            x = xs.reshape(C, Bsz * H * W)
            layer_outputs.append((x, H, W))
        elif t == 'route':
            idxs = [int(v) for v in blk['layers'].split(',')]
            srcs = [layer_outputs[j] for j in idxs]
            x = jnp.concatenate([sv[0] for sv in srcs], axis=0)  # channel concat (dim 1 NCHW)
            H, W = srcs[0][1], srcs[0][2]
            layer_outputs.append((x, H, W))
        elif t == 'shortcut':
            # Standalone fallback (in this config shortcuts are fused into the conv above).
            j = int(blk['from'])
            a_cm = layer_outputs[-1][0]
            b_cm = layer_outputs[j][0]
            x = pl.pallas_call(
                add_kernel,
                out_shape=jax.ShapeDtypeStruct(a_cm.shape, jnp.float32),
                in_specs=[_VMEM] * 2, out_specs=_VMEM,
            )(a_cm, b_cm)
            layer_outputs.append((x, H, W))
        elif t == 'yolo':
            # Standalone fallback (in this config yolo always follows a conv and is fused).
            mask = [int(v) for v in blk['mask'].split(',')]
            anchors = [ANCHORS[m] for m in mask]
            D = 5 + int(blk['classes'])
            G = H
            stride_ = IMG_SIZE / G
            awh = yolo_awh_column(anchors, D, stride_)
            y = pl.pallas_call(
                functools.partial(yolo_kernel, D=D, G=G, stride=float(stride_)),
                out_shape=jax.ShapeDtypeStruct(x.shape, jnp.float32),
                in_specs=[_VMEM] * 2, out_specs=_VMEM,
            )(x, awh)
            A = x.shape[0] // D
            det = head_to_detections(y, B, A, D, G)
            detections.append(det)
            layer_outputs.append((None, H, W))
        i += 1
    return jnp.concatenate(detections, axis=1)  # (B, sum_i A*G_i*G_i, 5+C)


if __name__ == "__main__":
    key = jax.random.PRNGKey(0)
    kx, kp = jax.random.split(key)
    x = jax.random.normal(kx, (2, 4, IMG_SIZE, IMG_SIZE), jnp.float32)  # NCHW input
    params = init_params(BLOCKS, in_channels=4, key=kp)
    fwd = jax.jit(lambda xx, pp: darknet_forward(xx, BLOCKS, pp))
    out = jax.block_until_ready(fwd(x, params))
    expected = (2, 3 * 8 * 8 + 3 * 16 * 16, 5 + NUM_CLASSES)  # (2, 960, 8)
    assert out.shape == expected, (out.shape, expected)
    assert bool(jnp.all(jnp.isfinite(out)))
    print("KERNEL_OK")
</pallas_src>

<mosaic_0001>
module attributes {stable_mosaic.version = 11 : i64} {
  func.func @conv_fused_kernel(%arg0: memref<8x36xbf16, #tpu.memory_space<vmem>>, %arg1: memref<36x512xbf16, #tpu.memory_space<vmem>>, %arg2: memref<8x1xf32, #tpu.memory_space<vmem>>, %arg3: memref<8x1xf32, #tpu.memory_space<vmem>>, %arg4: memref<8x512xf32, #tpu.memory_space<vmem>>) attributes {dimension_semantics = [], scalar_prefetch = 0 : i64, scratch_operands = 0 : i64, tpu.core_type = #tpu.core_type<tc>} {
    %c0 = arith.constant 0 : index
    %c0_0 = arith.constant 0 : index
    %0 = vector.load %arg0[%c0, %c0_0] : memref<8x36xbf16, #tpu.memory_space<vmem>>, vector<8x36xbf16>
    %c0_1 = arith.constant 0 : index
    %c0_2 = arith.constant 0 : index
    %1 = vector.load %arg1[%c0_1, %c0_2] : memref<36x512xbf16, #tpu.memory_space<vmem>>, vector<36x512xbf16>
    %cst = arith.constant dense<0.000000e+00> : vector<8x512xf32>
    %2 = tpu.matmul %0, %1, %cst {dimension_numbers = #tpu.dot_dimension_numbers<[1], [0], [0], [1], [0, 0, 1, 1], [], []>} : vector<8x36xbf16>, vector<36x512xbf16>, vector<8x512xf32> -> vector<8x512xf32>
    %c0_3 = arith.constant 0 : index
    %c0_4 = arith.constant 0 : index
    %3 = vector.load %arg2[%c0_3, %c0_4] : memref<8x1xf32, #tpu.memory_space<vmem>>, vector<8x1xf32>
    %4 = vector.broadcast %3 : vector<8x1xf32> to vector<8x512xf32>
    %5 = arith.mulf %2, %4 : vector<8x512xf32>
    %c0_5 = arith.constant 0 : index
    %c0_6 = arith.constant 0 : index
    %6 = vector.load %arg3[%c0_5, %c0_6] : memref<8x1xf32, #tpu.memory_space<vmem>>, vector<8x1xf32>
    %7 = vector.broadcast %6 : vector<8x1xf32> to vector<8x512xf32>
    %8 = arith.addf %5, %7 : vector<8x512xf32>
    %cst_7 = arith.constant 0.000000e+00 : f32
    %9 = vector.broadcast %cst_7 : f32 to vector<8x512xf32>
    %10 = arith.cmpf ogt, %8, %9 : vector<8x512xf32>
    %cst_8 = arith.constant 1.000000e-01 : f32
    %11 = vector.broadcast %cst_8 : f32 to vector<8x512xf32>
    %12 = arith.mulf %11, %8 : vector<8x512xf32>
    %13 = arith.select %10, %8, %12 : vector<8x512xi1>, vector<8x512xf32>
    %c0_9 = arith.constant 0 : index
    %c0_10 = arith.constant 0 : index
    %14 = vector.load %arg4[%c0_9, %c0_10] : memref<8x512xf32, #tpu.memory_space<vmem>>, vector<8x512xf32>
    tpu.vector_store %arg4[%c0_9, %c0_10], %13 {strides = array<i32>} : memref<8x512xf32, #tpu.memory_space<vmem>>, vector<8x512xf32>,
    return
  }
}

module attributes {stable_mosaic.version = 11 : i64} {
  func.func @max4_kernel(%arg0: memref<8x128xf32, #tpu.memory_space<vmem>>, %arg1: memref<8x128xf32, #tpu.memory_space<vmem>>, %arg2: memref<8x128xf32, #tpu.memory_space<vmem>>, %arg3: memref<8x128xf32, #tpu.memory_space<vmem>>, %arg4: memref<8x128xf32, #tpu.memory_space<vmem>>) attributes {dimension_semantics = [], scalar_prefetch = 0 : i64, scratch_operands = 0 : i64, tpu.core_type = #tpu.core_type<tc>} {
    %c0 = arith.constant 0 : index
    %c0_0 = arith.constant 0 : index
    %0 = vector.load %arg0[%c0, %c0_0] : memref<8x128xf32, #tpu.memory_space<vmem>>, vector<8x128xf32>
    %c0_1 = arith.constant 0 : index
    %c0_2 = arith.constant 0 : index
    %1 = vector.load %arg1[%c0_1, %c0_2] : memref<8x128xf32, #tpu.memory_space<vmem>>, vector<8x128xf32>
    %2 = arith.maximumf %0, %1 : vector<8x128xf32>
    %c0_3 = arith.constant 0 : index
    %c0_4 = arith.constant 0 : index
    %3 = vector.load %arg2[%c0_3, %c0_4] : memref<8x128xf32, #tpu.memory_space<vmem>>, vector<8x128xf32>
    %c0_5 = arith.constant 0 : index
    %c0_6 = arith.constant 0 : index
    %4 = vector.load %arg3[%c0_5, %c0_6] : memref<8x128xf32, #tpu.memory_space<vmem>>, vector<8x128xf32>
    %5 = arith.maximumf %3, %4 : vector<8x128xf32>
    %6 = arith.maximumf %2, %5 : vector<8x128xf32>
    %c0_7 = arith.constant 0 : index
    %c0_8 = arith.constant 0 : index
    %7 = vector.load %arg4[%c0_7, %c0_8] : memref<8x128xf32, #tpu.memory_space<vmem>>, vector<8x128xf32>
    tpu.vector_store %arg4[%c0_7, %c0_8], %6 {strides = array<i32>} : memref<8x128xf32, #tpu.memory_space<vmem>>, vector<8x128xf32>,
    return
  }
}

module attributes {stable_mosaic.version = 11 : i64} {
  func.func @conv_fused_kernel(%arg0: memref<8x16xbf16, #tpu.memory_space<vmem>>, %arg1: memref<16x128xbf16, #tpu.memory_space<vmem>>, %arg2: memref<8x1xf32, #tpu.memory_space<vmem>>, %arg3: memref<8x1xf32, #tpu.memory_space<vmem>>, %arg4: memref<8x128xf32, #tpu.memory_space<vmem>>) attributes {dimension_semantics = [], scalar_prefetch = 0 : i64, scratch_operands = 0 : i64, tpu.core_type = #tpu.core_type<tc>} {
    %c0 = arith.constant 0 : index
    %c0_0 = arith.constant 0 : index
    %0 = vector.load %arg0[%c0, %c0_0] : memref<8x16xbf16, #tpu.memory_space<vmem>>, vector<8x16xbf16>
    %c0_1 = arith.constant 0 : index
    %c0_2 = arith.constant 0 : index
    %1 = vector.load %arg1[%c0_1, %c0_2] : memref<16x128xbf16, #tpu.memory_space<vmem>>, vector<16x128xbf16>
    %cst = arith.constant dense<0.000000e+00> : vector<8x128xf32>
    %2 = tpu.matmul %0, %1, %cst {dimension_numbers = #tpu.dot_dimension_numbers<[1], [0], [0], [1], [0, 0, 1, 1], [], []>} : vector<8x16xbf16>, vector<16x128xbf16>, vector<8x128xf32> -> vector<8x128xf32>
    %c0_3 = arith.constant 0 : index
    %c0_4 = arith.constant 0 : index
    %3 = vector.load %arg2[%c0_3, %c0_4] : memref<8x1xf32, #tpu.memory_space<vmem>>, vector<8x1xf32>
    %4 = vector.broadcast %3 : vector<8x1xf32> to vector<8x128xf32>
    %5 = arith.mulf %2, %4 : vector<8x128xf32>
    %c0_5 = arith.constant 0 : index
    %c0_6 = arith.constant 0 : index
    %6 = vector.load %arg3[%c0_5, %c0_6] : memref<8x1xf32, #tpu.memory_space<vmem>>, vector<8x1xf32>
    %7 = vector.broadcast %6 : vector<8x1xf32> to vector<8x128xf32>
    %8 = arith.addf %5, %7 : vector<8x128xf32>
    %cst_7 = arith.constant 0.000000e+00 : f32
    %9 = vector.broadcast %cst_7 : f32 to vector<8x128xf32>
    %10 = arith.cmpf ogt, %8, %9 : vector<8x128xf32>
    %cst_8 = arith.constant 1.000000e-01 : f32
    %11 = vector.broadcast %cst_8 : f32 to vector<8x128xf32>
    %12 = arith.mulf %11, %8 : vector<8x128xf32>
    %13 = arith.select %10, %8, %12 : vector<8x128xi1>, vector<8x128xf32>
    %c0_9 = arith.constant 0 : index
    %c0_10 = arith.constant 0 : index
    %14 = vector.load %arg4[%c0_9, %c0_10] : memref<8x128xf32, #tpu.memory_space<vmem>>, vector<8x128xf32>
    tpu.vector_store %arg4[%c0_9, %c0_10], %13 {strides = array<i32>} : memref<8x128xf32, #tpu.memory_space<vmem>>, vector<8x128xf32>,
    return
  }
}

module attributes {stable_mosaic.version = 11 : i64} {
  func.func @conv_fused_kernel(%arg0: memref<16x72xbf16, #tpu.memory_space<vmem>>, %arg1: memref<72x128xbf16, #tpu.memory_space<vmem>>, %arg2: memref<16x1xf32, #tpu.memory_space<vmem>>, %arg3: memref<16x1xf32, #tpu.memory_space<vmem>>, %arg4: memref<16x128xf32, #tpu.memory_space<vmem>>) attributes {dimension_semantics = [], scalar_prefetch = 0 : i64, scratch_operands = 0 : i64, tpu.core_type = #tpu.core_type<tc>} {
    %c0 = arith.constant 0 : index
    %c0_0 = arith.constant 0 : index
    %0 = vector.load %arg0[%c0, %c0_0] : memref<16x72xbf16, #tpu.memory_space<vmem>>, vector<16x72xbf16>
    %c0_1 = arith.constant 0 : index
    %c0_2 = arith.constant 0 : index
    %1 = vector.load %arg1[%c0_1, %c0_2] : memref<72x128xbf16, #tpu.memory_space<vmem>>, vector<72x128xbf16>
    %cst = arith.constant dense<0.000000e+00> : vector<16x128xf32>
    %2 = tpu.matmul %0, %1, %cst {dimension_numbers = #tpu.dot_dimension_numbers<[1], [0], [0], [1], [0, 0, 1, 1], [], []>} : vector<16x72xbf16>, vector<72x128xbf16>, vector<16x128xf32> -> vector<16x128xf32>
    %c0_3 = arith.constant 0 : index
    %c0_4 = arith.constant 0 : index
    %3 = vector.load %arg2[%c0_3, %c0_4] : memref<16x1xf32, #tpu.memory_space<vmem>>, vector<16x1xf32>
    %4 = vector.broadcast %3 : vector<16x1xf32> to vector<16x128xf32>
    %5 = arith.mulf %2, %4 : vector<16x128xf32>
    %c0_5 = arith.constant 0 : index
    %c0_6 = arith.constant 0 : index
    %6 = vector.load %arg3[%c0_5, %c0_6] : memref<16x1xf32, #tpu.memory_space<vmem>>, vector<16x1xf32>
    %7 = vector.broadcast %6 : vector<16x1xf32> to vector<16x128xf32>
    %8 = arith.addf %5, %7 : vector<16x128xf32>
    %cst_7 = arith.constant 0.000000e+00 : f32
    %9 = vector.broadcast %cst_7 : f32 to vector<16x128xf32>
    %10 = arith.cmpf ogt, %8, %9 : vector<16x128xf32>
    %cst_8 = arith.constant 1.000000e-01 : f32
    %11 = vector.broadcast %cst_8 : f32 to vector<16x128xf32>
    %12 = arith.mulf %11, %8 : vector<16x128xf32>
    %13 = arith.select %10, %8, %12 : vector<16x128xi1>, vector<16x128xf32>
    %c0_9 = arith.constant 0 : index
    %c0_10 = arith.constant 0 : index
    %14 = vector.load %arg4[%c0_9, %c0_10] : memref<16x128xf32, #tpu.memory_space<vmem>>, vector<16x128xf32>
    tpu.vector_store %arg4[%c0_9, %c0_10], %13 {strides = array<i32>} : memref<16x128xf32, #tpu.memory_space<vmem>>, vector<16x128xf32>,
    return
  }
}

module attributes {stable_mosaic.version = 11 : i64} {
  func.func @conv_fused_kernel(%arg0: memref<16x72xbf16, #tpu.memory_space<vmem>>, %arg1: memref<72x128xbf16, #tpu.memory_space<vmem>>, %arg2: memref<16x1xf32, #tpu.memory_space<vmem>>, %arg3: memref<16x1xf32, #tpu.memory_space<vmem>>, %arg4: memref<16x128xf32, #tpu.memory_space<vmem>>, %arg5: memref<16x128xf32, #tpu.memory_space<vmem>>) attributes {dimension_semantics = [], scalar_prefetch = 0 : i64, scratch_operands = 0 : i64, tpu.core_type = #tpu.core_type<tc>} {
    %c0 = arith.constant 0 : index
    %c0_0 = arith.constant 0 : index
    %0 = vector.load %arg0[%c0, %c0_0] : memref<16x72xbf16, #tpu.memory_space<vmem>>, vector<16x72xbf16>
    %c0_1 = arith.constant 0 : index
    %c0_2 = arith.constant 0 : index
    %1 = vector.load %arg1[%c0_1, %c0_2] : memref<72x128xbf16, #tpu.memory_space<vmem>>, vector<72x128xbf16>
    %cst = arith.constant dense<0.000000e+00> : vector<16x128xf32>
    %2 = tpu.matmul %0, %1, %cst {dimension_numbers = #tpu.dot_dimension_numbers<[1], [0], [0], [1], [0, 0, 1, 1], [], []>} : vector<16x72xbf16>, vector<72x128xbf16>, vector<16x128xf32> -> vector<16x128xf32>
    %c0_3 = arith.constant 0 : index
    %c0_4 = arith.constant 0 : index
    %3 = vector.load %arg2[%c0_3, %c0_4] : memref<16x1xf32, #tpu.memory_space<vmem>>, vector<16x1xf32>
    %4 = vector.broadcast %3 : vector<16x1xf32> to vector<16x128xf32>
    %5 = arith.mulf %2, %4 : vector<16x128xf32>
    %c0_5 = arith.constant 0 : index
    %c0_6 = arith.constant 0 : index
    %6 = vector.load %arg3[%c0_5, %c0_6] : memref<16x1xf32, #tpu.memory_space<vmem>>, vector<16x1xf32>
    %7 = vector.broadcast %6 : vector<16x1xf32> to vector<16x128xf32>
    %8 = arith.addf %5, %7 : vector<16x128xf32>
    %cst_7 = arith.constant 0.000000e+00 : f32
    %9 = vector.broadcast %cst_7 : f32 to vector<16x128xf32>
    %10 = arith.cmpf ogt, %8, %9 : vector<16x128xf32>
    %cst_8 = arith.constant 1.000000e-01 : f32
    %11 = vector.broadcast %cst_8 : f32 to vector<16x128xf32>
    %12 = arith.mulf %11, %8 : vector<16x128xf32>
    %13 = arith.select %10, %8, %12 : vector<16x128xi1>, vector<16x128xf32>
    %c0_9 = arith.constant 0 : index
    %c0_10 = arith.constant 0 : index
    %14 = vector.load %arg4[%c0_9, %c0_10] : memref<16x128xf32, #tpu.memory_space<vmem>>, vector<16x128xf32>
    %15 = arith.addf %13, %14 : vector<16x128xf32>
    %c0_11 = arith.constant 0 : index
    %c0_12 = arith.constant 0 : index
    %16 = vector.load %arg5[%c0_11, %c0_12] : memref<16x128xf32, #tpu.memory_space<vmem>>, vector<16x128xf32>
    tpu.vector_store %arg5[%c0_11, %c0_12], %15 {strides = array<i32>} : memref<16x128xf32, #tpu.memory_space<vmem>>, vector<16x128xf32>,
    return
  }
}

module attributes {stable_mosaic.version = 11 : i64} {
  func.func @conv_fused_kernel(%arg0: memref<16x144xbf16, #tpu.memory_space<vmem>>, %arg1: memref<144x512xbf16, #tpu.memory_space<vmem>>, %arg2: memref<16x1xf32, #tpu.memory_space<vmem>>, %arg3: memref<16x1xf32, #tpu.memory_space<vmem>>, %arg4: memref<16x512xf32, #tpu.memory_space<vmem>>) attributes {dimension_semantics = [], scalar_prefetch = 0 : i64, scratch_operands = 0 : i64, tpu.core_type = #tpu.core_type<tc>} {
    %c0 = arith.constant 0 : index
    %c0_0 = arith.constant 0 : index
    %0 = vector.load %arg0[%c0, %c0_0] : memref<16x144xbf16, #tpu.memory_space<vmem>>, vector<16x144xbf16>
    %c0_1 = arith.constant 0 : index
    %c0_2 = arith.constant 0 : index
    %1 = vector.load %arg1[%c0_1, %c0_2] : memref<144x512xbf16, #tpu.memory_space<vmem>>, vector<144x512xbf16>
    %cst = arith.constant dense<0.000000e+00> : vector<16x512xf32>
    %2 = tpu.matmul %0, %1, %cst {dimension_numbers = #tpu.dot_dimension_numbers<[1], [0], [0], [1], [0, 0, 1, 1], [], []>} : vector<16x144xbf16>, vector<144x512xbf16>, vector<16x512xf32> -> vector<16x512xf32>
    %c0_3 = arith.constant 0 : index
    %c0_4 = arith.constant 0 : index
    %3 = vector.load %arg2[%c0_3, %c0_4] : memref<16x1xf32, #tpu.memory_space<vmem>>, vector<16x1xf32>
    %4 = vector.broadcast %3 : vector<16x1xf32> to vector<16x512xf32>
    %5 = arith.mulf %2, %4 : vector<16x512xf32>
    %c0_5 = arith.constant 0 : index
    %c0_6 = arith.constant 0 : index
    %6 = vector.load %arg3[%c0_5, %c0_6] : memref<16x1xf32, #tpu.memory_space<vmem>>, vector<16x1xf32>
    %7 = vector.broadcast %6 : vector<16x1xf32> to vector<16x512xf32>
    %8 = arith.addf %5, %7 : vector<16x512xf32>
    %cst_7 = arith.constant 0.000000e+00 : f32
    %9 = vector.broadcast %cst_7 : f32 to vector<16x512xf32>
    %10 = arith.cmpf ogt, %8, %9 : vector<16x512xf32>
    %cst_8 = arith.constant 1.000000e-01 : f32
    %11 = vector.broadcast %cst_8 : f32 to vector<16x512xf32>
    %12 = arith.mulf %11, %8 : vector<16x512xf32>
    %13 = arith.select %10, %8, %12 : vector<16x512xi1>, vector<16x512xf32>
    %c0_9 = arith.constant 0 : index
    %c0_10 = arith.constant 0 : index
    %14 = vector.load %arg4[%c0_9, %c0_10] : memref<16x512xf32, #tpu.memory_space<vmem>>, vector<16x512xf32>
    tpu.vector_store %arg4[%c0_9, %c0_10], %13 {strides = array<i32>} : memref<16x512xf32, #tpu.memory_space<vmem>>, vector<16x512xf32>,
    return
  }
}

module attributes {stable_mosaic.version = 11 : i64} {
  func.func @conv_fused_kernel(%arg0: memref<24x16xbf16, #tpu.memory_space<vmem>>, %arg1: memref<16x512xbf16, #tpu.memory_space<vmem>>, %arg2: memref<24x1xf32, #tpu.memory_space<vmem>>, %arg3: memref<24x1xf32, #tpu.memory_space<vmem>>, %arg4: memref<24x1xf32, #tpu.memory_space<vmem>>, %arg5: memref<24x512xf32, #tpu.memory_space<vmem>>) attributes {dimension_semantics = [], scalar_prefetch = 0 : i64, scratch_operands = 0 : i64, tpu.core_type = #tpu.core_type<tc>} {
    %c0 = arith.constant 0 : index
    %c0_0 = arith.constant 0 : index
    %0 = vector.load %arg0[%c0, %c0_0] : memref<24x16xbf16, #tpu.memory_space<vmem>>, vector<24x16xbf16>
    %c0_1 = arith.constant 0 : index
    %c0_2 = arith.constant 0 : index
    %1 = vector.load %arg1[%c0_1, %c0_2] : memref<16x512xbf16, #tpu.memory_space<vmem>>, vector<16x512xbf16>
    %cst = arith.constant dense<0.000000e+00> : vector<24x512xf32>
    %2 = tpu.matmul %0, %1, %cst {dimension_numbers = #tpu.dot_dimension_numbers<[1], [0], [0], [1], [0, 0, 1, 1], [], []>} : vector<24x16xbf16>, vector<16x512xbf16>, vector<24x512xf32> -> vector<24x512xf32>
    %c0_3 = arith.constant 0 : index
    %c0_4 = arith.constant 0 : index
    %3 = vector.load %arg2[%c0_3, %c0_4] : memref<24x1xf32, #tpu.memory_space<vmem>>, vector<24x1xf32>
    %4 = vector.broadcast %3 : vector<24x1xf32> to vector<24x512xf32>
    %5 = arith.mulf %2, %4 : vector<24x512xf32>
    %c0_5 = arith.constant 0 : index
    %c0_6 = arith.constant 0 : index
    %6 = vector.load %arg3[%c0_5, %c0_6] : memref<24x1xf32, #tpu.memory_space<vmem>>, vector<24x1xf32>
    %7 = vector.broadcast %6 : vector<24x1xf32> to vector<24x512xf32>
    %8 = arith.addf %5, %7 : vector<24x512xf32>
    %c0_7 = arith.constant 0 : index
    %c0_8 = arith.constant 0 : index
    %9 = vector.load %arg4[%c0_7, %c0_8] : memref<24x1xf32, #tpu.memory_space<vmem>>, vector<24x1xf32>
    %10 = tpu.iota {dimensions = array<i32: 1>} : vector<24x512xi32>
    %11 = arith.sitofp %10 : vector<24x512xi32> to vector<24x512xf32>
    %12 = tpu.iota {dimensions = array<i32: 0>} : vector<24x512xi32>
    %13 = arith.sitofp %12 : vector<24x512xi32> to vector<24x512xf32>
    %cst_9 = arith.constant 2.560000e+02 : f32
    %14 = vector.broadcast %cst_9 : f32 to vector<24x512xf32>
    %15 = arith.divf %11, %14 : vector<24x512xf32>
    %cst_10 = arith.constant 9.99999974E-5 : f32
    %16 = vector.broadcast %cst_10 : f32 to vector<24x512xf32>
    %17 = arith.addf %15, %16 : vector<24x512xf32>
    %18 = math.floor %17 : vector<24x512xf32>
    %cst_11 = arith.constant 2.560000e+02 : f32
    %19 = vector.broadcast %cst_11 : f32 to vector<24x512xf32>
    %20 = arith.mulf %18, %19 : vector<24x512xf32>
    %21 = arith.subf %11, %20 : vector<24x512xf32>
    %cst_12 = arith.constant 1.600000e+01 : f32
    %22 = vector.broadcast %cst_12 : f32 to vector<24x512xf32>
    %23 = arith.divf %21, %22 : vector<24x512xf32>
    %cst_13 = arith.constant 9.99999974E-5 : f32
    %24 = vector.broadcast %cst_13 : f32 to vector<24x512xf32>
    %25 = arith.addf %23, %24 : vector<24x512xf32>
    %26 = math.floor %25 : vector<24x512xf32>
    %cst_14 = arith.constant 1.600000e+01 : f32
    %27 = vector.broadcast %cst_14 : f32 to vector<24x512xf32>
    %28 = arith.mulf %26, %27 : vector<24x512xf32>
    %29 = arith.subf %21, %28 : vector<24x512xf32>
    %cst_15 = arith.constant 8.000000e+00 : f32
    %30 = vector.broadcast %cst_15 : f32 to vector<24x512xf32>
    %31 = arith.divf %13, %30 : vector<24x512xf32>
    %cst_16 = arith.constant 9.99999974E-5 : f32
    %32 = vector.broadcast %cst_16 : f32 to vector<24x512xf32>
    %33 = arith.addf %31, %32 : vector<24x512xf32>
    %34 = math.floor %33 : vector<24x512xf32>
    %cst_17 = arith.constant 8.000000e+00 : f32
    %35 = vector.broadcast %cst_17 : f32 to vector<24x512xf32>
    %36 = arith.mulf %34, %35 : vector<24x512xf32>
    %37 = arith.subf %13, %36 : vector<24x512xf32>
    %38 = arith.negf %8 : vector<24x512xf32>
    %39 = math.exp %38 : vector<24x512xf32>
    %cst_18 = arith.constant 1.000000e+00 : f32
    %40 = vector.broadcast %cst_18 : f32 to vector<24x512xf32>
    %41 = arith.addf %40, %39 : vector<24x512xf32>
    %42 = arith.divf %40, %41 : vector<24x512xf32>
    %cst_19 = arith.constant 5.000000e-01 : f32
    %43 = vector.broadcast %cst_19 : f32 to vector<24x512xf32>
    %44 = arith.cmpf olt, %37, %43 : vector<24x512xf32>
    %45 = arith.select %44, %29, %26 : vector<24x512xi1>, vector<24x512xf32>
    %46 = arith.addf %42, %45 : vector<24x512xf32>
    %cst_20 = arith.constant 1.000000e+00 : f32
    %47 = vector.broadcast %cst_20 : f32 to vector<24x512xf32>
    %48 = arith.mulf %46, %47 : vector<24x512xf32>
    %cst_21 = arith.constant 1.500000e+00 : f32
    %49 = vector.broadcast %cst_21 : f32 to vector<24x512xf32>
    %50 = arith.cmpf ogt, %37, %49 : vector<24x512xf32>
    %cst_22 = arith.constant 3.500000e+00 : f32
    %51 = vector.broadcast %cst_22 : f32 to vector<24x512xf32>
    %52 = arith.cmpf olt, %37, %51 : vector<24x512xf32>
    %53 = arith.andi %50, %52 : vector<24x512xi1>
    %cst_23 = arith.constant 0.000000e+00 : f32
    %54 = vector.broadcast %cst_23 : f32 to vector<24x512xf32>
    %55 = arith.select %53, %8, %54 : vector<24x512xi1>, vector<24x512xf32>
    %56 = math.exp %55 : vector<24x512xf32>
    %57 = vector.broadcast %9 : vector<24x1xf32> to vector<24x512xf32>
    %58 = arith.mulf %56, %57 : vector<24x512xf32>
    %cst_24 = arith.constant 1.000000e+00 : f32
    %59 = vector.broadcast %cst_24 : f32 to vector<24x512xf32>
    %60 = arith.mulf %58, %59 : vector<24x512xf32>
    %cst_25 = arith.constant 1.500000e+00 : f32
    %61 = vector.broadcast %cst_25 : f32 to vector<24x512xf32>
    %62 = arith.cmpf olt, %37, %61 : vector<24x512xf32>
    %cst_26 = arith.constant 3.500000e+00 : f32
    %63 = vector.broadcast %cst_26 : f32 to vector<24x512xf32>
    %64 = arith.cmpf olt, %37, %63 : vector<24x512xf32>
    %65 = arith.select %64, %60, %42 : vector<24x512xi1>, vector<24x512xf32>
    %66 = arith.select %62, %48, %65 : vector<24x512xi1>, vector<24x512xf32>
    %c0_27 = arith.constant 0 : index
    %c0_28 = arith.constant 0 : index
    %67 = vector.load %arg5[%c0_27, %c0_28] : memref<24x512xf32, #tpu.memory_space<vmem>>, vector<24x512xf32>
    tpu.vector_store %arg5[%c0_27, %c0_28], %66 {strides = array<i32>} : memref<24x512xf32, #tpu.memory_space<vmem>>, vector<24x512xf32>,
    return
  }
}

module attributes {stable_mosaic.version = 11 : i64} {
  func.func @conv_fused_kernel(%arg0: memref<24x16xbf16, #tpu.memory_space<vmem>>, %arg1: memref<16x128xbf16, #tpu.memory_space<vmem>>, %arg2: memref<24x1xf32, #tpu.memory_space<vmem>>, %arg3: memref<24x1xf32, #tpu.memory_space<vmem>>, %arg4: memref<24x1xf32, #tpu.memory_space<vmem>>, %arg5: memref<24x128xf32, #tpu.memory_space<vmem>>) attributes {dimension_semantics = [], scalar_prefetch = 0 : i64, scratch_operands = 0 : i64, tpu.core_type = #tpu.core_type<tc>} {
    %c0 = arith.constant 0 : index
    %c0_0 = arith.constant 0 : index
    %0 = vector.load %arg0[%c0, %c0_0] : memref<24x16xbf16, #tpu.memory_space<vmem>>, vector<24x16xbf16>
    %c0_1 = arith.constant 0 : index
    %c0_2 = arith.constant 0 : index
    %1 = vector.load %arg1[%c0_1, %c0_2] : memref<16x128xbf16, #tpu.memory_space<vmem>>, vector<16x128xbf16>
    %cst = arith.constant dense<0.000000e+00> : vector<24x128xf32>
    %2 = tpu.matmul %0, %1, %cst {dimension_numbers = #tpu.dot_dimension_numbers<[1], [0], [0], [1], [0, 0, 1, 1], [], []>} : vector<24x16xbf16>, vector<16x128xbf16>, vector<24x128xf32> -> vector<24x128xf32>
    %c0_3 = arith.constant 0 : index
    %c0_4 = arith.constant 0 : index
    %3 = vector.load %arg2[%c0_3, %c0_4] : memref<24x1xf32, #tpu.memory_space<vmem>>, vector<24x1xf32>
    %4 = vector.broadcast %3 : vector<24x1xf32> to vector<24x128xf32>
    %5 = arith.mulf %2, %4 : vector<24x128xf32>
    %c0_5 = arith.constant 0 : index
    %c0_6 = arith.constant 0 : index
    %6 = vector.load %arg3[%c0_5, %c0_6] : memref<24x1xf32, #tpu.memory_space<vmem>>, vector<24x1xf32>
    %7 = vector.broadcast %6 : vector<24x1xf32> to vector<24x128xf32>
    %8 = arith.addf %5, %7 : vector<24x128xf32>
    %c0_7 = arith.constant 0 : index
    %c0_8 = arith.constant 0 : index
    %9 = vector.load %arg4[%c0_7, %c0_8] : memref<24x1xf32, #tpu.memory_space<vmem>>, vector<24x1xf32>
    %10 = tpu.iota {dimensions = array<i32: 1>} : vector<24x128xi32>
    %11 = arith.sitofp %10 : vector<24x128xi32> to vector<24x128xf32>
    %12 = tpu.iota {dimensions = array<i32: 0>} : vector<24x128xi32>
    %13 = arith.sitofp %12 : vector<24x128xi32> to vector<24x128xf32>
    %cst_9 = arith.constant 6.400000e+01 : f32
    %14 = vector.broadcast %cst_9 : f32 to vector<24x128xf32>
    %15 = arith.divf %11, %14 : vector<24x128xf32>
    %cst_10 = arith.constant 9.99999974E-5 : f32
    %16 = vector.broadcast %cst_10 : f32 to vector<24x128xf32>
    %17 = arith.addf %15, %16 : vector<24x128xf32>
    %18 = math.floor %17 : vector<24x128xf32>
    %cst_11 = arith.constant 6.400000e+01 : f32
    %19 = vector.broadcast %cst_11 : f32 to vector<24x128xf32>
    %20 = arith.mulf %18, %19 : vector<24x128xf32>
    %21 = arith.subf %11, %20 : vector<24x128xf32>
    %cst_12 = arith.constant 8.000000e+00 : f32
    %22 = vector.broadcast %cst_12 : f32 to vector<24x128xf32>
    %23 = arith.divf %21, %22 : vector<24x128xf32>
    %cst_13 = arith.constant 9.99999974E-5 : f32
    %24 = vector.broadcast %cst_13 : f32 to vector<24x128xf32>
    %25 = arith.addf %23, %24 : vector<24x128xf32>
    %26 = math.floor %25 : vector<24x128xf32>
    %cst_14 = arith.constant 8.000000e+00 : f32
    %27 = vector.broadcast %cst_14 : f32 to vector<24x128xf32>
    %28 = arith.mulf %26, %27 : vector<24x128xf32>
    %29 = arith.subf %21, %28 : vector<24x128xf32>
    %cst_15 = arith.constant 8.000000e+00 : f32
    %30 = vector.broadcast %cst_15 : f32 to vector<24x128xf32>
    %31 = arith.divf %13, %30 : vector<24x128xf32>
    %cst_16 = arith.constant 9.99999974E-5 : f32
    %32 = vector.broadcast %cst_16 : f32 to vector<24x128xf32>
    %33 = arith.addf %31, %32 : vector<24x128xf32>
    %34 = math.floor %33 : vector<24x128xf32>
    %cst_17 = arith.constant 8.000000e+00 : f32
    %35 = vector.broadcast %cst_17 : f32 to vector<24x128xf32>
    %36 = arith.mulf %34, %35 : vector<24x128xf32>
    %37 = arith.subf %13, %36 : vector<24x128xf32>
    %38 = arith.negf %8 : vector<24x128xf32>
    %39 = math.exp %38 : vector<24x128xf32>
    %cst_18 = arith.constant 1.000000e+00 : f32
    %40 = vector.broadcast %cst_18 : f32 to vector<24x128xf32>
    %41 = arith.addf %40, %39 : vector<24x128xf32>
    %42 = arith.divf %40, %41 : vector<24x128xf32>
    %cst_19 = arith.constant 5.000000e-01 : f32
    %43 = vector.broadcast %cst_19 : f32 to vector<24x128xf32>
    %44 = arith.cmpf olt, %37, %43 : vector<24x128xf32>
    %45 = arith.select %44, %29, %26 : vector<24x128xi1>, vector<24x128xf32>
    %46 = arith.addf %42, %45 : vector<24x128xf32>
    %cst_20 = arith.constant 2.000000e+00 : f32
    %47 = vector.broadcast %cst_20 : f32 to vector<24x128xf32>
    %48 = arith.mulf %46, %47 : vector<24x128xf32>
    %cst_21 = arith.constant 1.500000e+00 : f32
    %49 = vector.broadcast %cst_21 : f32 to vector<24x128xf32>
    %50 = arith.cmpf ogt, %37, %49 : vector<24x128xf32>
    %cst_22 = arith.constant 3.500000e+00 : f32
    %51 = vector.broadcast %cst_22 : f32 to vector<24x128xf32>
    %52 = arith.cmpf olt, %37, %51 : vector<24x128xf32>
    %53 = arith.andi %50, %52 : vector<24x128xi1>
    %cst_23 = arith.constant 0.000000e+00 : f32
    %54 = vector.broadcast %cst_23 : f32 to vector<24x128xf32>
    %55 = arith.select %53, %8, %54 : vector<24x128xi1>, vector<24x128xf32>
    %56 = math.exp %55 : vector<24x128xf32>
    %57 = vector.broadcast %9 : vector<24x1xf32> to vector<24x128xf32>
    %58 = arith.mulf %56, %57 : vector<24x128xf32>
    %cst_24 = arith.constant 2.000000e+00 : f32
    %59 = vector.broadcast %cst_24 : f32 to vector<24x128xf32>
    %60 = arith.mulf %58, %59 : vector<24x128xf32>
    %cst_25 = arith.constant 1.500000e+00 : f32
    %61 = vector.broadcast %cst_25 : f32 to vector<24x128xf32>
    %62 = arith.cmpf olt, %37, %61 : vector<24x128xf32>
    %cst_26 = arith.constant 3.500000e+00 : f32
    %63 = vector.broadcast %cst_26 : f32 to vector<24x128xf32>
    %64 = arith.cmpf olt, %37, %63 : vector<24x128xf32>
    %65 = arith.select %64, %60, %42 : vector<24x128xi1>, vector<24x128xf32>
    %66 = arith.select %62, %48, %65 : vector<24x128xi1>, vector<24x128xf32>
    %c0_27 = arith.constant 0 : index
    %c0_28 = arith.constant 0 : index
    %67 = vector.load %arg5[%c0_27, %c0_28] : memref<24x128xf32, #tpu.memory_space<vmem>>, vector<24x128xf32>
    tpu.vector_store %arg5[%c0_27, %c0_28], %66 {strides = array<i32>} : memref<24x128xf32, #tpu.memory_space<vmem>>, vector<24x128xf32>,
    return
  }
}

</mosaic_0001>

<llo_original>
// kernel: _lambda_.10
$region0: #{_lambda_.10}
  #allocation0 [shape = 'u32[]', space=smem, size = 0x4, offset = 0x4, fixed_abs, tag = 'smem constant byte address 0x4 - core index']
  #allocation1 [shape = 'u32[144,128]{1,0:T(1,128)}', space=vmem, size = 0x12000, scoped, tag = 'internal scratch']
  %s0 = inlined_call_operand.vmem [shape: f32[8,128], index: 0, kind: input, shape index: {}]
  %s1 = inlined_call_operand.vmem [shape: f32[8,128], index: 1, kind: input, shape index: {}]
  %s2 = inlined_call_operand.vmem [shape: f32[8,128], index: 2, kind: input, shape index: {}]
  %s3 = inlined_call_operand.vmem [shape: f32[8,128], index: 3, kind: input, shape index: {}]
  %s4 = inlined_call_operand.vmem [shape: f32[8,128], index: 4, kind: output, shape index: {}]
  %s5 = sld [smem:[#allocation0]]
  $region26: #{_lambda_.10} parent=0
    _
  %s7 = ssub.s32 1, %s5
  %s8 = scalar_select 0, %s7, %s5
  // Predicated region
  $region2: #{_lambda_.10} parent=0 // pred_check
    _
  $region3: #{_lambda_.10} parent=0 // pred_check_branch
    %10 = sbr.rel (0) target = $region5
  $region4: #{_lambda_.10} parent=0 // pred_region
    _
  $region5: #{_lambda_.10} parent=0 // pred_fallthru
    _
  // Predicated region
  $region6: #{_lambda_.10} parent=0 // pred_check
    _
  $region7: #{_lambda_.10} parent=0 // pred_check_branch
    %12 = sbr.rel (0) target = $region9
  $region8: #{_lambda_.10} parent=0 // pred_region
    _
  $region9: #{_lambda_.10} parent=0 // pred_fallthru
    _
  // Predicated region
  $region10: #{_lambda_.10} parent=0 // pred_check
    _
  $region11: #{_lambda_.10} parent=0 // pred_check_branch
    %14 = sbr.rel (0) target = $region13
  $region12: #{_lambda_.10} parent=0 // pred_region
    _
  $region13: #{_lambda_.10} parent=0 // pred_fallthru
    _
  // Predicated region
  $region14: #{_lambda_.10} parent=0 // pred_check
    _
  $region15: #{_lambda_.10} parent=0 // pred_check_branch
    %16 = sbr.rel (0) target = $region17
  $region16: #{_lambda_.10} parent=0 // pred_region
    _
  $region17: #{_lambda_.10} parent=0 // pred_fallthru
    _
  %v17 = vld [vmem:[%s0] sm:$0xff]
  %v18 = vld [vmem:[%s1] sm:$0xff]
  %v19 = vmax.f32 %v17, %v18
  %v20 = vld [vmem:[%s2] sm:$0xff]
  %v21 = vld [vmem:[%s3] sm:$0xff]
  %v22 = vmax.f32 %v20, %v21
  %v23 = vmax.f32 %v19, %v22
  %24 = vst [vmem:[%s4] sm:$0xff] %v23
  // Predicated region
  $region18: #{_lambda_.10} parent=0 // pred_check
    _
  $region19: #{_lambda_.10} parent=0 // pred_check_branch
    %26 = sbr.rel (0) target = $region21
  $region20: #{_lambda_.10} parent=0 // pred_region
    _
  $region21: #{_lambda_.10} parent=0 // pred_fallthru
    _
  // Predicated region
  $region22: #{_lambda_.10} parent=0 // pred_check
    _
  $region23: #{_lambda_.10} parent=0 // pred_check_branch
    %28 = sbr.rel (0) target = $region25
  $region24: #{_lambda_.10} parent=0 // pred_region
    _
  $region25: #{_lambda_.10} parent=0 // pred_fallthru
    _

// kernel: _lambda_.9
$region0: #{_lambda_.9}
  #allocation0 [shape = 'u32[]', space=smem, size = 0x4, offset = 0x4, fixed_abs, tag = 'smem constant byte address 0x4 - core index']
  #allocation1 [shape = 'u32[144,128]{1,0:T(1,128)}', space=vmem, size = 0x12000, scoped, tag = 'internal scratch']
  %s0 = inlined_call_operand.vmem [shape: bf16[8,36], index: 0, kind: input, shape index: {}]
  %s1 = inlined_call_operand.vmem [shape: bf16[36,512], index: 1, kind: input, shape index: {}]
  %s2 = inlined_call_operand.vmem [shape: f32[8,1], index: 2, kind: input, shape index: {}]
  %s3 = inlined_call_operand.vmem [shape: f32[8,1], index: 3, kind: input, shape index: {}]
  %s4 = inlined_call_operand.vmem [shape: f32[8,512], index: 4, kind: output, shape index: {}]
  %s5 = sld [smem:[#allocation0]]
  $region26: #{_lambda_.9} parent=0
    _
  %s7 = ssub.s32 1, %s5
  %s8 = scalar_select 0, %s7, %s5
  // Predicated region
  $region2: #{_lambda_.9} parent=0 // pred_check
    _
  $region3: #{_lambda_.9} parent=0 // pred_check_branch
    %10 = sbr.rel (0) target = $region5
  $region4: #{_lambda_.9} parent=0 // pred_region
    _
  $region5: #{_lambda_.9} parent=0 // pred_fallthru
    _
  // Predicated region
  $region6: #{_lambda_.9} parent=0 // pred_check
    _
  $region7: #{_lambda_.9} parent=0 // pred_check_branch
    %12 = sbr.rel (0) target = $region9
  $region8: #{_lambda_.9} parent=0 // pred_region
    _
  $region9: #{_lambda_.9} parent=0 // pred_fallthru
    _
  // Predicated region
  $region10: #{_lambda_.9} parent=0 // pred_check
    _
  $region11: #{_lambda_.9} parent=0 // pred_check_branch
    %14 = sbr.rel (0) target = $region13
  $region12: #{_lambda_.9} parent=0 // pred_region
    _
  $region13: #{_lambda_.9} parent=0 // pred_fallthru
    _
  // Predicated region
  $region14: #{_lambda_.9} parent=0 // pred_check
    _
  $region15: #{_lambda_.9} parent=0 // pred_check_branch
    %16 = sbr.rel (0) target = $region17
  $region16: #{_lambda_.9} parent=0 // pred_region
    _
  $region17: #{_lambda_.9} parent=0 // pred_fallthru
    _
  %v18 = vld [vmem:[%s0] sm:$0xf]
  %v19 = vld [vmem:[%s1] sm:$0xff]
  %v20 = vld [vmem:[%s1 + $0x8] sm:$0xff]
  %v21 = vld [vmem:[%s1 + $0x10] sm:$0xff]
  %v22 = vld [vmem:[%s1 + $0x18] sm:$0xff]
  %v23 = vld [vmem:[%s1 + $0x20] sm:$0xff]
  %v24 = vld [vmem:[%s1 + $0x28] sm:$0xff]
  %v25 = vld [vmem:[%s1 + $0x30] sm:$0xff]
  %v26 = vld [vmem:[%s1 + $0x38] sm:$0xff]
  %v27 = vld [vmem:[%s1 + $0x40] sm:$0x33]
  %v28 = vld [vmem:[%s1 + $0x48] sm:$0x33]
  %v39 = vunpack.c.l.b16 %v19
  %v40 = vunpack.c.h.b16 %v19
  %v41 = vunpack.c.l.b16 %v20
  %v42 = vunpack.c.h.b16 %v20
  %v43 = vunpack.c.l.b16 %v21
  %v44 = vunpack.c.h.b16 %v21
  %v45 = vunpack.c.l.b16 %v22
  %v46 = vunpack.c.h.b16 %v22
  %v47 = vunpack.c.l.b16 %v23
  %v48 = vunpack.c.h.b16 %v23
  %v49 = vunpack.c.l.b16 %v24
  %v50 = vunpack.c.h.b16 %v24
  %v51 = vunpack.c.l.b16 %v25
  %v52 = vunpack.c.h.b16 %v25
  %v53 = vunpack.c.l.b16 %v26
  %v54 = vunpack.c.h.b16 %v26
  %v55 = vunpack.c.l.b16 %v27
  %v56 = vunpack.c.h.b16 %v27
  %v57 = vunpack.c.l.b16 %v28
  %v58 = vunpack.c.h.b16 %v28
  %v59 = vpack.c.b16 %v43, %v39
  %v60 = vpack.c.b16 %v44, %v40
  %v61 = vpack.c.b16 %v45, %v41
  %v62 = vpack.c.b16 %v46, %v42
  %v63 = vpack.c.b16 %v51, %v47
  %v64 = vpack.c.b16 %v52, %v48
  %v65 = vpack.c.b16 %v53, %v49
  %v66 = vpack.c.b16 %v54, %v50
  %v67 = vpack.c.b16 %v55, %v55
  %v68 = vpack.c.b16 %v56, %v56
  %v69 = vpack.c.b16 %v57, %v57
  %v70 = vpack.c.b16 %v58, %v58
  %vm79 = vcmask 293888
  %v81 = vsel %vm79, %v18, 0
  %vm83 = vcmask 1041408
  %v85 = vsel %vm83, %v67, 0
  %v88 = vsel %vm83, %v68, 0
  %v91 = vsel %vm83, %v69, 0
  %v94 = vsel %vm83, %v70, 0
  %96 = vmatprep.subr.bf16.mxu0 %v60
  %97 = vmatpush1.bf16.msra.mxu0 %v59
  %98 = vmatprep.subr.bf16.mxu0 %v64
  %99 = vmatpush1.bf16.msra.mxu0 %v63
  %100 = vmatprep.subr.bf16.mxu0 %v88
  %101 = vmatpush1.bf16.msra.mxu0 %v85
  %102 = vmatprep.subr.bf16.mxu0 0
  %103 = vmatpush1.bf16.msra.mxu0 0
  %104 = vmatprep.subr.bf16.mxu0 0
  %105 = vmatpush1.bf16.msra.mxu0 0
  %106 = vmatprep.subr.bf16.mxu0 0
  %107 = vmatpush1.bf16.msra.mxu0 0
  %108 = vmatprep.subr.bf16.mxu0 0
  %109 = vmatpush1.bf16.msra.mxu0 0
  %110 = vmatprep.subr.bf16.mxu0 0
  %111 = vmatpush1.bf16.msra.mxu0 0
  %112 = vmatprep.subr.bf16.mxu0 0
  %113 = vmatpush1.bf16.msra.mxu0 0
  %114 = vmatprep.subr.bf16.mxu0 0
  %115 = vmatpush1.bf16.msra.mxu0 0
  %116 = vmatprep.subr.bf16.mxu0 0
  %117 = vmatpush1.bf16.msra.mxu0 0
  %118 = vmatprep.subr.bf16.mxu0 0
  %119 = vmatpush1.bf16.msra.mxu0 0
  %120 = vmatprep.subr.bf16.mxu0 0
  %121 = vmatpush1.bf16.msra.mxu0 0
  %122 = vmatprep.subr.bf16.mxu0 0
  %123 = vmatpush1.bf16.msra.mxu0 0
  %124 = vmatprep.subr.bf16.mxu0 0
  %125 = vmatpush1.bf16.msra.mxu0 0
  %126 = vmatprep.subr.bf16.mxu0 0
  %127 = vmatpush1.bf16.msra.mxu0 0
  %128 = vmatprep.mubr.bf16.mxu0 0
  %129 = vmatmul.mubr.bf16.gmra.mrb[0].mxu0 %v81
  %v130 = vpop.f32.mrb[0].mxu0
  %v131 = vadd.f32 0.0, %v130
  %v132 = vpop.f32.mrb[0].mxu0
  %v133 = vadd.f32 0.0, %v132
  %v134 = vpop.f32.mrb[0].mxu0
  %v135 = vpop.f32.mrb[0].mxu0
  %136 = vdwg.mxu0
  %137 = vmatprep.subr.bf16.mxu0 %v62
  %138 = vmatpush1.bf16.msra.mxu0 %v61
  %139 = vmatprep.subr.bf16.mxu0 %v66
  %140 = vmatpush1.bf16.msra.mxu0 %v65
  %141 = vmatprep.subr.bf16.mxu0 %v94
  %142 = vmatpush1.bf16.msra.mxu0 %v91
  %143 = vmatprep.subr.bf16.mxu0 0
  %144 = vmatpush1.bf16.msra.mxu0 0
  %145 = vmatprep.subr.bf16.mxu0 0
  %146 = vmatpush1.bf16.msra.mxu0 0
  %147 = vmatprep.subr.bf16.mxu0 0
  %148 = vmatpush1.bf16.msra.mxu0 0
  %149 = vmatprep.subr.bf16.mxu0 0
  %150 = vmatpush1.bf16.msra.mxu0 0
  %151 = vmatprep.subr.bf16.mxu0 0
  %152 = vmatpush1.bf16.msra.mxu0 0
  %153 = vmatprep.subr.bf16.mxu0 0
  %154 = vmatpush1.bf16.msra.mxu0 0
  %155 = vmatprep.subr.bf16.mxu0 0
  %156 = vmatpush1.bf16.msra.mxu0 0
  %157 = vmatprep.subr.bf16.mxu0 0
  %158 = vmatpush1.bf16.msra.mxu0 0
  %159 = vmatprep.subr.bf16.mxu0 0
  %160 = vmatpush1.bf16.msra.mxu0 0
  %161 = vmatprep.subr.bf16.mxu0 0
  %162 = vmatpush1.bf16.msra.mxu0 0
  %163 = vmatprep.subr.bf16.mxu0 0
  %164 = vmatpush1.bf16.msra.mxu0 0
  %165 = vmatprep.subr.bf16.mxu0 0
  %166 = vmatpush1.bf16.msra.mxu0 0
  %167 = vmatprep.subr.bf16.mxu0 0
  %168 = vmatpush1.bf16.msra.mxu0 0
  %169 = vmatprep.mubr.bf16.mxu0 0
  %170 = vmatmul.mubr.bf16.gmra.mrb[0].mxu0 %v81
  %v171 = vpop.f32.mrb[0].mxu0
  %v172 = vadd.f32 0.0, %v171
  %v173 = vpop.f32.mrb[0].mxu0
  %v174 = vadd.f32 0.0, %v173
  %v175 = vpop.f32.mrb[0].mxu0
  %v176 = vpop.f32.mrb[0].mxu0
  %177 = vdwg.mxu0
  %v178 = vld [vmem:[%s2] sm:$0xff]
  %180 = vset.pattern.permute.xlu0 0
  %181 = vperm.xlu0 %180, %v178
  %v182 = vpop.permute.xlu0 %181
  %v184 = vmul.f32 %v131, %v182
  %v185 = vmul.f32 %v133, %v182
  %v186 = vmul.f32 %v172, %v182
  %v187 = vmul.f32 %v174, %v182
  %v188 = vld [vmem:[%s3] sm:$0xff]
  %190 = vset.pattern.permute.xlu0 0
  %191 = vperm.xlu0 %190, %v188
  %v192 = vpop.permute.xlu0 %191
  %v194 = vadd.f32 %v184, %v192
  %v195 = vadd.f32 %v185, %v192
  %v196 = vadd.f32 %v186, %v192
  %v197 = vadd.f32 %v187, %v192
  %vm198 = vcmp.gt.f32.partialorder %v194, 0.0
  %vm199 = vcmp.gt.f32.partialorder %v195, 0.0
  %vm200 = vcmp.gt.f32.partialorder %v196, 0.0
  %vm201 = vcmp.gt.f32.partialorder %v197, 0.0
  %v202 = vmul.f32 %v194, 0.1
  %v203 = vmul.f32 %v195, 0.1
  %v204 = vmul.f32 %v196, 0.1
  %v205 = vmul.f32 %v197, 0.1
  %v206 = vsel %vm198, %v194, %v202
  %v207 = vsel %vm199, %v195, %v203
  %v208 = vsel %vm200, %v196, %v204
  %v209 = vsel %vm201, %v197, %v205
  %210 = vst [vmem:[%s4] sm:$0xff] %v206
  %211 = vst [vmem:[%s4 + $0x8] sm:$0xff] %v207
  %212 = vst [vmem:[%s4 + $0x10] sm:$0xff] %v208
  %213 = vst [vmem:[%s4 + $0x18] sm:$0xff] %v209
  // Predicated region
  $region18: #{_lambda_.9} parent=0 // pred_check
    _
  $region19: #{_lambda_.9} parent=0 // pred_check_branch
    %215 = sbr.rel (0) target = $region21
  $region20: #{_lambda_.9} parent=0 // pred_region
    _
  $region21: #{_lambda_.9} parent=0 // pred_fallthru
    _
  // Predicated region
  $region22: #{_lambda_.9} parent=0 // pred_check
    _
  $region23: #{_lambda_.9} parent=0 // pred_check_branch
    %217 = sbr.rel (0) target = $region25
  $region24: #{_lambda_.9} parent=0 // pred_region
    _
  $region25: #{_lambda_.9} parent=0 // pred_fallthru
    _

// kernel: _lambda_.12
$region0: #{_lambda_.12}
  #allocation0 [shape = 'u32[]', space=smem, size = 0x4, offset = 0x4, fixed_abs, tag = 'smem constant byte address 0x4 - core index']
  #allocation1 [shape = 'u32[144,128]{1,0:T(1,128)}', space=vmem, size = 0x12000, scoped, tag = 'internal scratch']
  %s0 = inlined_call_operand.vmem [shape: bf16[8,16], index: 0, kind: input, shape index: {}]
  %s1 = inlined_call_operand.vmem [shape: bf16[16,128], index: 1, kind: input, shape index: {}]
  %s2 = inlined_call_operand.vmem [shape: f32[8,1], index: 2, kind: input, shape index: {}]
  %s3 = inlined_call_operand.vmem [shape: f32[8,1], index: 3, kind: input, shape index: {}]
  %s4 = inlined_call_operand.vmem [shape: f32[8,128], index: 4, kind: output, shape index: {}]
  %s5 = sld [smem:[#allocation0]]
  $region26: #{_lambda_.12} parent=0
    _
  %s7 = ssub.s32 1, %s5
  %s8 = scalar_select 0, %s7, %s5
  // Predicated region
  $region2: #{_lambda_.12} parent=0 // pred_check
    _
  $region3: #{_lambda_.12} parent=0 // pred_check_branch
    %10 = sbr.rel (0) target = $region5
  $region4: #{_lambda_.12} parent=0 // pred_region
    _
  $region5: #{_lambda_.12} parent=0 // pred_fallthru
    _
  // Predicated region
  $region6: #{_lambda_.12} parent=0 // pred_check
    _
  $region7: #{_lambda_.12} parent=0 // pred_check_branch
    %12 = sbr.rel (0) target = $region9
  $region8: #{_lambda_.12} parent=0 // pred_region
    _
  $region9: #{_lambda_.12} parent=0 // pred_fallthru
    _
  // Predicated region
  $region10: #{_lambda_.12} parent=0 // pred_check
    _
  $region11: #{_lambda_.12} parent=0 // pred_check_branch
    %14 = sbr.rel (0) target = $region13
  $region12: #{_lambda_.12} parent=0 // pred_region
    _
  $region13: #{_lambda_.12} parent=0 // pred_fallthru
    _
  // Predicated region
  $region14: #{_lambda_.12} parent=0 // pred_check
    _
  $region15: #{_lambda_.12} parent=0 // pred_check_branch
    %16 = sbr.rel (0) target = $region17
  $region16: #{_lambda_.12} parent=0 // pred_region
    _
  $region17: #{_lambda_.12} parent=0 // pred_fallthru
    _
  %v18 = vld [vmem:[%s0] sm:$0xf]
  %v19 = vld [vmem:[%s1] sm:$0xf]
  %v20 = vld [vmem:[%s1 + $0x4] sm:$0xf]
  %v23 = vunpack.c.l.b16 %v19
  %v24 = vunpack.c.l.b16 %v20
  %v25 = vpack.c.b16 %v24, %v23
  %vm27 = vcmask 130048
  %v29 = vsel %vm27, %v18, 0
  %31 = vmatprep.subr.bf16.mxu0 0
  %32 = vmatpush1.bf16.msra.mxu0 %v25
  %33 = vmatprep.subr.bf16.mxu0 0
  %34 = vmatpush1.bf16.msra.mxu0 0
  %35 = vmatprep.subr.bf16.mxu0 0
  %36 = vmatpush1.bf16.msra.mxu0 0
  %37 = vmatprep.subr.bf16.mxu0 0
  %38 = vmatpush1.bf16.msra.mxu0 0
  %39 = vmatprep.subr.bf16.mxu0 0
  %40 = vmatpush1.bf16.msra.mxu0 0
  %41 = vmatprep.subr.bf16.mxu0 0
  %42 = vmatpush1.bf16.msra.mxu0 0
  %43 = vmatprep.subr.bf16.mxu0 0
  %44 = vmatpush1.bf16.msra.mxu0 0
  %45 = vmatprep.subr.bf16.mxu0 0
  %46 = vmatpush1.bf16.msra.mxu0 0
  %47 = vmatprep.subr.bf16.mxu0 0
  %48 = vmatpush1.bf16.msra.mxu0 0
  %49 = vmatprep.subr.bf16.mxu0 0
  %50 = vmatpush1.bf16.msra.mxu0 0
  %51 = vmatprep.subr.bf16.mxu0 0
  %52 = vmatpush1.bf16.msra.mxu0 0
  %53 = vmatprep.subr.bf16.mxu0 0
  %54 = vmatpush1.bf16.msra.mxu0 0
  %55 = vmatprep.subr.bf16.mxu0 0
  %56 = vmatpush1.bf16.msra.mxu0 0
  %57 = vmatprep.subr.bf16.mxu0 0
  %58 = vmatpush1.bf16.msra.mxu0 0
  %59 = vmatprep.subr.bf16.mxu0 0
  %60 = vmatpush1.bf16.msra.mxu0 0
  %61 = vmatprep.subr.bf16.mxu0 0
  %62 = vmatpush1.bf16.msra.mxu0 0
  %63 = vmatprep.mubr.bf16.mxu0 0
  %64 = vmatmul.mubr.bf16.gmra.mrb[0].mxu0 %v29
  %v65 = vpop.f32.mrb[0].mxu0
  %v66 = vadd.f32 0.0, %v65
  %v67 = vpop.f32.mrb[0].mxu0
  %v68 = vpop.f32.mrb[0].mxu0
  %v69 = vpop.f32.mrb[0].mxu0
  %70 = vdwg.mxu0
  %v71 = vld [vmem:[%s2] sm:$0xff]
  %73 = vset.pattern.permute.xlu0 0
  %74 = vperm.xlu0 %73, %v71
  %v75 = vpop.permute.xlu0 %74
  %v77 = vmul.f32 %v66, %v75
  %v78 = vld [vmem:[%s3] sm:$0xff]
  %80 = vset.pattern.permute.xlu0 0
  %81 = vperm.xlu0 %80, %v78
  %v82 = vpop.permute.xlu0 %81
  %v84 = vadd.f32 %v77, %v82
  %vm85 = vcmp.gt.f32.partialorder %v84, 0.0
  %v86 = vmul.f32 %v84, 0.1
  %v87 = vsel %vm85, %v84, %v86
  %88 = vst [vmem:[%s4] sm:$0xff] %v87
  // Predicated region
  $region18: #{_lambda_.12} parent=0 // pred_check
    _
  $region19: #{_lambda_.12} parent=0 // pred_check_branch
    %90 = sbr.rel (0) target = $region21
  $region20: #{_lambda_.12} parent=0 // pred_region
    _
  $region21: #{_lambda_.12} parent=0 // pred_fallthru
    _
  // Predicated region
  $region22: #{_lambda_.12} parent=0 // pred_check
    _
  $region23: #{_lambda_.12} parent=0 // pred_check_branch
    %92 = sbr.rel (0) target = $region25
  $region24: #{_lambda_.12} parent=0 // pred_region
    _
  $region25: #{_lambda_.12} parent=0 // pred_fallthru
    _

// kernel: _lambda_.11
$region0: #{_lambda_.11}
  #allocation0 [shape = 'u32[]', space=smem, size = 0x4, offset = 0x4, fixed_abs, tag = 'smem constant byte address 0x4 - core index']
  #allocation1 [shape = 'u32[144,128]{1,0:T(1,128)}', space=vmem, size = 0x12000, scoped, tag = 'internal scratch']
  %s0 = inlined_call_operand.vmem [shape: bf16[16,72], index: 0, kind: input, shape index: {}]
  %s1 = inlined_call_operand.vmem [shape: bf16[72,128], index: 1, kind: input, shape index: {}]
  %s2 = inlined_call_operand.vmem [shape: f32[16,1], index: 2, kind: input, shape index: {}]
  %s3 = inlined_call_operand.vmem [shape: f32[16,1], index: 3, kind: input, shape index: {}]
  %s4 = inlined_call_operand.vmem [shape: f32[16,128], index: 4, kind: output, shape index: {}]
  %s5 = sld [smem:[#allocation0]]
  $region26: #{_lambda_.11} parent=0
    _
  %s7 = ssub.s32 1, %s5
  %s8 = scalar_select 0, %s7, %s5
  // Predicated region
  $region2: #{_lambda_.11} parent=0 // pred_check
    _
  $region3: #{_lambda_.11} parent=0 // pred_check_branch
    %10 = sbr.rel (0) target = $region5
  $region4: #{_lambda_.11} parent=0 // pred_region
    _
  $region5: #{_lambda_.11} parent=0 // pred_fallthru
    _
  // Predicated region
  $region6: #{_lambda_.11} parent=0 // pred_check
    _
  $region7: #{_lambda_.11} parent=0 // pred_check_branch
    %12 = sbr.rel (0) target = $region9
  $region8: #{_lambda_.11} parent=0 // pred_region
    _
  $region9: #{_lambda_.11} parent=0 // pred_fallthru
    _
  // Predicated region
  $region10: #{_lambda_.11} parent=0 // pred_check
    _
  $region11: #{_lambda_.11} parent=0 // pred_check_branch
    %14 = sbr.rel (0) target = $region13
  $region12: #{_lambda_.11} parent=0 // pred_region
    _
  $region13: #{_lambda_.11} parent=0 // pred_fallthru
    _
  // Predicated region
  $region14: #{_lambda_.11} parent=0 // pred_check
    _
  $region15: #{_lambda_.11} parent=0 // pred_check_branch
    %16 = sbr.rel (0) target = $region17
  $region16: #{_lambda_.11} parent=0 // pred_region
    _
  $region17: #{_lambda_.11} parent=0 // pred_fallthru
    _
  %v18 = vld [vmem:[%s0] sm:$0xf]
  %v19 = vld [vmem:[%s0 + $0x4] sm:$0xf]
  %v20 = vld [vmem:[%s1] sm:$0xf]
  %v21 = vld [vmem:[%s1 + $0x4] sm:$0xf]
  %v22 = vld [vmem:[%s1 + $0x8] sm:$0xf]
  %v23 = vld [vmem:[%s1 + $0xc] sm:$0xf]
  %v24 = vld [vmem:[%s1 + $0x10] sm:$0xf]
  %v25 = vld [vmem:[%s1 + $0x14] sm:$0xf]
  %v26 = vld [vmem:[%s1 + $0x18] sm:$0xf]
  %v27 = vld [vmem:[%s1 + $0x1c] sm:$0xf]
  %v28 = vld [vmem:[%s1 + $0x20] sm:$0xf]
  %v31 = vunpack.c.l.b16 %v18
  %v32 = vunpack.c.l.b16 %v19
  %v33 = vpack.c.b16 %v32, %v31
  %v43 = vunpack.c.l.b16 %v20
  %v44 = vunpack.c.l.b16 %v21
  %v45 = vunpack.c.l.b16 %v22
  %v46 = vunpack.c.l.b16 %v23
  %v47 = vunpack.c.l.b16 %v24
  %v48 = vunpack.c.l.b16 %v25
  %v49 = vunpack.c.l.b16 %v26
  %v50 = vunpack.c.l.b16 %v27
  %v51 = vunpack.c.l.b16 %v28
  %v52 = vpack.c.b16 %v44, %v43
  %v53 = vpack.c.b16 %v46, %v45
  %v54 = vpack.c.b16 %v48, %v47
  %v55 = vpack.c.b16 %v50, %v49
  %v56 = vpack.c.b16 %v51, %v51
  %vm61 = vcmask 588800
  %v63 = vsel %vm61, %v33, 0
  %vm65 = vcmask 1043456
  %v67 = vsel %vm65, %v56, 0
  %69 = vmatprep.subr.bf16.mxu0 0
  %70 = vmatpush1.bf16.msra.mxu0 %v52
  %71 = vmatprep.subr.bf16.mxu0 0
  %72 = vmatpush1.bf16.msra.mxu0 %v53
  %73 = vmatprep.subr.bf16.mxu0 0
  %74 = vmatpush1.bf16.msra.mxu0 %v54
  %75 = vmatprep.subr.bf16.mxu0 0
  %76 = vmatpush1.bf16.msra.mxu0 %v55
  %77 = vmatprep.subr.bf16.mxu0 0
  %78 = vmatpush1.bf16.msra.mxu0 %v67
  %79 = vmatprep.subr.bf16.mxu0 0
  %80 = vmatpush1.bf16.msra.mxu0 0
  %81 = vmatprep.subr.bf16.mxu0 0
  %82 = vmatpush1.bf16.msra.mxu0 0
  %83 = vmatprep.subr.bf16.mxu0 0
  %84 = vmatpush1.bf16.msra.mxu0 0
  %85 = vmatprep.subr.bf16.mxu0 0
  %86 = vmatpush1.bf16.msra.mxu0 0
  %87 = vmatprep.subr.bf16.mxu0 0
  %88 = vmatpush1.bf16.msra.mxu0 0
  %89 = vmatprep.subr.bf16.mxu0 0
  %90 = vmatpush1.bf16.msra.mxu0 0
  %91 = vmatprep.subr.bf16.mxu0 0
  %92 = vmatpush1.bf16.msra.mxu0 0
  %93 = vmatprep.subr.bf16.mxu0 0
  %94 = vmatpush1.bf16.msra.mxu0 0
  %95 = vmatprep.subr.bf16.mxu0 0
  %96 = vmatpush1.bf16.msra.mxu0 0
  %97 = vmatprep.subr.bf16.mxu0 0
  %98 = vmatpush1.bf16.msra.mxu0 0
  %99 = vmatprep.subr.bf16.mxu0 0
  %100 = vmatpush1.bf16.msra.mxu0 0
  %101 = vmatprep.mubr.bf16.mxu0 0
  %102 = vmatmul.mubr.bf16.gmra.mrb[0].mxu0 %v63
  %v103 = vpop.f32.mrb[0].mxu0
  %v104 = vadd.f32 0.0, %v103
  %v105 = vpop.f32.mrb[0].mxu0
  %v106 = vpop.f32.mrb[0].mxu0
  %v107 = vadd.f32 0.0, %v106
  %v108 = vpop.f32.mrb[0].mxu0
  %109 = vdwg.mxu0
  %v110 = vld [vmem:[%s2] sm:$0xff]
  %v111 = vld [vmem:[%s2 + $0x8] sm:$0xff]
  %113 = vset.pattern.permute.xlu0 0
  %114 = vperm.xlu0 %113, %v110
  %v115 = vpop.permute.xlu0 %114
  %118 = vset.pattern.permute.xlu0 0
  %119 = vperm.xlu0 %118, %v111
  %v120 = vpop.permute.xlu0 %119
  %v122 = vmul.f32 %v104, %v115
  %v123 = vmul.f32 %v107, %v120
  %v124 = vld [vmem:[%s3] sm:$0xff]
  %v125 = vld [vmem:[%s3 + $0x8] sm:$0xff]
  %127 = vset.pattern.permute.xlu0 0
  %128 = vperm.xlu0 %127, %v124
  %v129 = vpop.permute.xlu0 %128
  %132 = vset.pattern.permute.xlu0 0
  %133 = vperm.xlu0 %132, %v125
  %v134 = vpop.permute.xlu0 %133
  %v136 = vadd.f32 %v122, %v129
  %v137 = vadd.f32 %v123, %v134
  %vm138 = vcmp.gt.f32.partialorder %v136, 0.0
  %vm139 = vcmp.gt.f32.partialorder %v137, 0.0
  %v140 = vmul.f32 %v136, 0.1
  %v141 = vmul.f32 %v137, 0.1
  %v142 = vsel %vm138, %v136, %v140
  %v143 = vsel %vm139, %v137, %v141
  %144 = vst [vmem:[%s4] sm:$0xff] %v142
  %145 = vst [vmem:[%s4 + $0x8] sm:$0xff] %v143
  // Predicated region
  $region18: #{_lambda_.11} parent=0 // pred_check
    _
  $region19: #{_lambda_.11} parent=0 // pred_check_branch
    %147 = sbr.rel (0) target = $region21
  $region20: #{_lambda_.11} parent=0 // pred_region
    _
  $region21: #{_lambda_.11} parent=0 // pred_fallthru
    _
  // Predicated region
  $region22: #{_lambda_.11} parent=0 // pred_check
    _
  $region23: #{_lambda_.11} parent=0 // pred_check_branch
    %149 = sbr.rel (0) target = $region25
  $region24: #{_lambda_.11} parent=0 // pred_region
    _
  $region25: #{_lambda_.11} parent=0 // pred_fallthru
    _

// kernel: _lambda_.13
$region0: #{_lambda_.13}
  #allocation0 [shape = 'u32[]', space=smem, size = 0x4, offset = 0x4, fixed_abs, tag = 'smem constant byte address 0x4 - core index']
  #allocation1 [shape = 'u32[144,128]{1,0:T(1,128)}', space=vmem, size = 0x12000, scoped, tag = 'internal scratch']
  %s0 = inlined_call_operand.vmem [shape: bf16[16,72], index: 0, kind: input, shape index: {}]
  %s1 = inlined_call_operand.vmem [shape: bf16[72,128], index: 1, kind: input, shape index: {}]
  %s2 = inlined_call_operand.vmem [shape: f32[16,1], index: 2, kind: input, shape index: {}]
  %s3 = inlined_call_operand.vmem [shape: f32[16,1], index: 3, kind: input, shape index: {}]
  %s4 = inlined_call_operand.vmem [shape: f32[16,128], index: 4, kind: input, shape index: {}]
  %s5 = inlined_call_operand.vmem [shape: f32[16,128], index: 5, kind: output, shape index: {}]
  %s6 = sld [smem:[#allocation0]]
  $region30: #{_lambda_.13} parent=0
    _
  %s8 = ssub.s32 1, %s6
  %s9 = scalar_select 0, %s8, %s6
  // Predicated region
  $region2: #{_lambda_.13} parent=0 // pred_check
    _
  $region3: #{_lambda_.13} parent=0 // pred_check_branch
    %11 = sbr.rel (0) target = $region5
  $region4: #{_lambda_.13} parent=0 // pred_region
    _
  $region5: #{_lambda_.13} parent=0 // pred_fallthru
    _
  // Predicated region
  $region6: #{_lambda_.13} parent=0 // pred_check
    _
  $region7: #{_lambda_.13} parent=0 // pred_check_branch
    %13 = sbr.rel (0) target = $region9
  $region8: #{_lambda_.13} parent=0 // pred_region
    _
  $region9: #{_lambda_.13} parent=0 // pred_fallthru
    _
  // Predicated region
  $region10: #{_lambda_.13} parent=0 // pred_check
    _
  $region11: #{_lambda_.13} parent=0 // pred_check_branch
    %15 = sbr.rel (0) target = $region13
  $region12: #{_lambda_.13} parent=0 // pred_region
    _
  $region13: #{_lambda_.13} parent=0 // pred_fallthru
    _
  // Predicated region
  $region14: #{_lambda_.13} parent=0 // pred_check
    _
  $region15: #{_lambda_.13} parent=0 // pred_check_branch
    %17 = sbr.rel (0) target = $region17
  $region16: #{_lambda_.13} parent=0 // pred_region
    _
  $region17: #{_lambda_.13} parent=0 // pred_fallthru
    _
  // Predicated region
  $region18: #{_lambda_.13} parent=0 // pred_check
    _
  $region19: #{_lambda_.13} parent=0 // pred_check_branch
    %19 = sbr.rel (0) target = $region21
  $region20: #{_lambda_.13} parent=0 // pred_region
    _
  $region21: #{_lambda_.13} parent=0 // pred_fallthru
    _
  %v21 = vld [vmem:[%s0] sm:$0xf]
  %v22 = vld [vmem:[%s0 + $0x4] sm:$0xf]
  %v23 = vld [vmem:[%s1] sm:$0xf]
  %v24 = vld [vmem:[%s1 + $0x4] sm:$0xf]
  %v25 = vld [vmem:[%s1 + $0x8] sm:$0xf]
  %v26 = vld [vmem:[%s1 + $0xc] sm:$0xf]
  %v27 = vld [vmem:[%s1 + $0x10] sm:$0xf]
  %v28 = vld [vmem:[%s1 + $0x14] sm:$0xf]
  %v29 = vld [vmem:[%s1 + $0x18] sm:$0xf]
  %v30 = vld [vmem:[%s1 + $0x1c] sm:$0xf]
  %v31 = vld [vmem:[%s1 + $0x20] sm:$0xf]
  %v34 = vunpack.c.l.b16 %v21
  %v35 = vunpack.c.l.b16 %v22
  %v36 = vpack.c.b16 %v35, %v34
  %v46 = vunpack.c.l.b16 %v23
  %v47 = vunpack.c.l.b16 %v24
  %v48 = vunpack.c.l.b16 %v25
  %v49 = vunpack.c.l.b16 %v26
  %v50 = vunpack.c.l.b16 %v27
  %v51 = vunpack.c.l.b16 %v28
  %v52 = vunpack.c.l.b16 %v29
  %v53 = vunpack.c.l.b16 %v30
  %v54 = vunpack.c.l.b16 %v31
  %v55 = vpack.c.b16 %v47, %v46
  %v56 = vpack.c.b16 %v49, %v48
  %v57 = vpack.c.b16 %v51, %v50
  %v58 = vpack.c.b16 %v53, %v52
  %v59 = vpack.c.b16 %v54, %v54
  %vm64 = vcmask 588800
  %v66 = vsel %vm64, %v36, 0
  %vm68 = vcmask 1043456
  %v70 = vsel %vm68, %v59, 0
  %72 = vmatprep.subr.bf16.mxu0 0
  %73 = vmatpush1.bf16.msra.mxu0 %v55
  %74 = vmatprep.subr.bf16.mxu0 0
  %75 = vmatpush1.bf16.msra.mxu0 %v56
  %76 = vmatprep.subr.bf16.mxu0 0
  %77 = vmatpush1.bf16.msra.mxu0 %v57
  %78 = vmatprep.subr.bf16.mxu0 0
  %79 = vmatpush1.bf16.msra.mxu0 %v58
  %80 = vmatprep.subr.bf16.mxu0 0
  %81 = vmatpush1.bf16.msra.mxu0 %v70
  %82 = vmatprep.subr.bf16.mxu0 0
  %83 = vmatpush1.bf16.msra.mxu0 0
  %84 = vmatprep.subr.bf16.mxu0 0
  %85 = vmatpush1.bf16.msra.mxu0 0
  %86 = vmatprep.subr.bf16.mxu0 0
  %87 = vmatpush1.bf16.msra.mxu0 0
  %88 = vmatprep.subr.bf16.mxu0 0
  %89 = vmatpush1.bf16.msra.mxu0 0
  %90 = vmatprep.subr.bf16.mxu0 0
  %91 = vmatpush1.bf16.msra.mxu0 0
  %92 = vmatprep.subr.bf16.mxu0 0
  %93 = vmatpush1.bf16.msra.mxu0 0
  %94 = vmatprep.subr.bf16.mxu0 0
  %95 = vmatpush1.bf16.msra.mxu0 0
  %96 = vmatprep.subr.bf16.mxu0 0
  %97 = vmatpush1.bf16.msra.mxu0 0
  %98 = vmatprep.subr.bf16.mxu0 0
  %99 = vmatpush1.bf16.msra.mxu0 0
  %100 = vmatprep.subr.bf16.mxu0 0
  %101 = vmatpush1.bf16.msra.mxu0 0
  %102 = vmatprep.subr.bf16.mxu0 0
  %103 = vmatpush1.bf16.msra.mxu0 0
  %104 = vmatprep.mubr.bf16.mxu0 0
  %105 = vmatmul.mubr.bf16.gmra.mrb[0].mxu0 %v66
  %v106 = vpop.f32.mrb[0].mxu0
  %v107 = vadd.f32 0.0, %v106
  %v108 = vpop.f32.mrb[0].mxu0
  %v109 = vpop.f32.mrb[0].mxu0
  %v110 = vadd.f32 0.0, %v109
  %v111 = vpop.f32.mrb[0].mxu0
  %112 = vdwg.mxu0
  %v113 = vld [vmem:[%s2] sm:$0xff]
  %v114 = vld [vmem:[%s2 + $0x8] sm:$0xff]
  %116 = vset.pattern.permute.xlu0 0
  %117 = vperm.xlu0 %116, %v113
  %v118 = vpop.permute.xlu0 %117
  %121 = vset.pattern.permute.xlu0 0
  %122 = vperm.xlu0 %121, %v114
  %v123 = vpop.permute.xlu0 %122
  %v125 = vmul.f32 %v107, %v118
  %v126 = vmul.f32 %v110, %v123
  %v127 = vld [vmem:[%s3] sm:$0xff]
  %v128 = vld [vmem:[%s3 + $0x8] sm:$0xff]
  %130 = vset.pattern.permute.xlu0 0
  %131 = vperm.xlu0 %130, %v127
  %v132 = vpop.permute.xlu0 %131
  %135 = vset.pattern.permute.xlu0 0
  %136 = vperm.xlu0 %135, %v128
  %v137 = vpop.permute.xlu0 %136
  %v139 = vadd.f32 %v125, %v132
  %v140 = vadd.f32 %v126, %v137
  %vm141 = vcmp.gt.f32.partialorder %v139, 0.0
  %vm142 = vcmp.gt.f32.partialorder %v140, 0.0
  %v143 = vmul.f32 %v139, 0.1
  %v144 = vmul.f32 %v140, 0.1
  %v145 = vsel %vm141, %v139, %v143
  %v146 = vsel %vm142, %v140, %v144
  %v147 = vld [vmem:[%s4] sm:$0xff]
  %v148 = vld [vmem:[%s4 + $0x8] sm:$0xff]
  %v149 = vadd.f32 %v145, %v147
  %v150 = vadd.f32 %v146, %v148
  %151 = vst [vmem:[%s5] sm:$0xff] %v149
  %152 = vst [vmem:[%s5 + $0x8] sm:$0xff] %v150
  // Predicated region
  $region22: #{_lambda_.13} parent=0 // pred_check
    _
  $region23: #{_lambda_.13} parent=0 // pred_check_branch
    %154 = sbr.rel (0) target = $region25
  $region24: #{_lambda_.13} parent=0 // pred_region
    _
  $region25: #{_lambda_.13} parent=0 // pred_fallthru
    _
  // Predicated region
  $region26: #{_lambda_.13} parent=0 // pred_check
    _
  $region27: #{_lambda_.13} parent=0 // pred_check_branch
    %156 = sbr.rel (0) target = $region29
  $region28: #{_lambda_.13} parent=0 // pred_region
    _
  $region29: #{_lambda_.13} parent=0 // pred_fallthru
    _

// kernel: _lambda_.16
$region0: #{_lambda_.16}
  #allocation0 [shape = 'u32[]', space=smem, size = 0x4, offset = 0x4, fixed_abs, tag = 'smem constant byte address 0x4 - core index']
  #allocation1 [shape = 'u32[144,128]{1,0:T(1,128)}', space=vmem, size = 0x12000, scoped, tag = 'internal scratch']
  %s0 = inlined_call_operand.vmem [shape: bf16[16,144], index: 0, kind: input, shape index: {}]
  %s1 = inlined_call_operand.vmem [shape: bf16[144,512], index: 1, kind: input, shape index: {}]
  %s2 = inlined_call_operand.vmem [shape: f32[16,1], index: 2, kind: input, shape index: {}]
  %s3 = inlined_call_operand.vmem [shape: f32[16,1], index: 3, kind: input, shape index: {}]
  %s4 = inlined_call_operand.vmem [shape: f32[16,512], index: 4, kind: output, shape index: {}]
  %s5 = sld [smem:[#allocation0]]
  $region26: #{_lambda_.16} parent=0
    _
  %s7 = ssub.s32 1, %s5
  %s8 = scalar_select 0, %s7, %s5
  // Predicated region
  $region2: #{_lambda_.16} parent=0 // pred_check
    _
  $region3: #{_lambda_.16} parent=0 // pred_check_branch
    %10 = sbr.rel (0) target = $region5
  $region4: #{_lambda_.16} parent=0 // pred_region
    _
  $region5: #{_lambda_.16} parent=0 // pred_fallthru
    _
  // Predicated region
  $region6: #{_lambda_.16} parent=0 // pred_check
    _
  $region7: #{_lambda_.16} parent=0 // pred_check_branch
    %12 = sbr.rel (0) target = $region9
  $region8: #{_lambda_.16} parent=0 // pred_region
    _
  $region9: #{_lambda_.16} parent=0 // pred_fallthru
    _
  // Predicated region
  $region10: #{_lambda_.16} parent=0 // pred_check
    _
  $region11: #{_lambda_.16} parent=0 // pred_check_branch
    %14 = sbr.rel (0) target = $region13
  $region12: #{_lambda_.16} parent=0 // pred_region
    _
  $region13: #{_lambda_.16} parent=0 // pred_fallthru
    _
  // Predicated region
  $region14: #{_lambda_.16} parent=0 // pred_check
    _
  $region15: #{_lambda_.16} parent=0 // pred_check_branch
    %16 = sbr.rel (0) target = $region17
  $region16: #{_lambda_.16} parent=0 // pred_region
    _
  $region17: #{_lambda_.16} parent=0 // pred_fallthru
    _
  %v18 = vld [vmem:[%s0] sm:$0xff]
  %v19 = vld [vmem:[%s0 + $0x8] sm:$0xff]
  %v20 = vld [vmem:[%s1] sm:$0xff]
  %v21 = vld [vmem:[%s1 + $0x8] sm:$0xff]
  %v22 = vld [vmem:[%s1 + $0x10] sm:$0xff]
  %v23 = vld [vmem:[%s1 + $0x18] sm:$0xff]
  %v24 = vld [vmem:[%s1 + $0x20] sm:$0xff]
  %v25 = vld [vmem:[%s1 + $0x28] sm:$0xff]
  %v26 = vld [vmem:[%s1 + $0x30] sm:$0xff]
  %v27 = vld [vmem:[%s1 + $0x38] sm:$0xff]
  %v28 = vld [vmem:[%s1 + $0x40] sm:$0xff]
  %v29 = vld [vmem:[%s1 + $0x48] sm:$0xff]
  %v30 = vld [vmem:[%s1 + $0x50] sm:$0xff]
  %v31 = vld [vmem:[%s1 + $0x58] sm:$0xff]
  %v32 = vld [vmem:[%s1 + $0x60] sm:$0xff]
  %v33 = vld [vmem:[%s1 + $0x68] sm:$0xff]
  %v34 = vld [vmem:[%s1 + $0x70] sm:$0xff]
  %v35 = vld [vmem:[%s1 + $0x78] sm:$0xff]
  %v36 = vld [vmem:[%s1 + $0x80] sm:$0xff]
  %v37 = vld [vmem:[%s1 + $0x88] sm:$0xff]
  %v38 = vld [vmem:[%s1 + $0x90] sm:$0xff]
  %v39 = vld [vmem:[%s1 + $0x98] sm:$0xff]
  %v40 = vld [vmem:[%s1 + $0xa0] sm:$0xff]
  %v41 = vld [vmem:[%s1 + $0xa8] sm:$0xff]
  %v42 = vld [vmem:[%s1 + $0xb0] sm:$0xff]
  %v43 = vld [vmem:[%s1 + $0xb8] sm:$0xff]
  %v44 = vld [vmem:[%s1 + $0xc0] sm:$0xff]
  %v45 = vld [vmem:[%s1 + $0xc8] sm:$0xff]
  %v46 = vld [vmem:[%s1 + $0xd0] sm:$0xff]
  %v47 = vld [vmem:[%s1 + $0xd8] sm:$0xff]
  %v48 = vld [vmem:[%s1 + $0xe0] sm:$0xff]
  %v49 = vld [vmem:[%s1 + $0xe8] sm:$0xff]
  %v50 = vld [vmem:[%s1 + $0xf0] sm:$0xff]
  %v51 = vld [vmem:[%s1 + $0xf8] sm:$0xff]
  %v52 = vld [vmem:[%s1 + $0x100] sm:$0xff]
  %v53 = vld [vmem:[%s1 + $0x108] sm:$0xff]
  %v54 = vld [vmem:[%s1 + $0x110] sm:$0xff]
  %v55 = vld [vmem:[%s1 + $0x118] sm:$0xff]
  %v58 = vunpack.c.l.b16 %v18
  %v59 = vunpack.c.h.b16 %v18
  %v60 = vunpack.c.l.b16 %v19
  %v61 = vunpack.c.h.b16 %v19
  %v62 = vpack.c.b16 %v60, %v58
  %v63 = vpack.c.b16 %v61, %v59
  %v101 = vunpack.c.l.b16 %v20
  %v102 = vunpack.c.h.b16 %v20
  %v103 = vunpack.c.l.b16 %v21
  %v104 = vunpack.c.h.b16 %v21
  %v105 = vunpack.c.l.b16 %v22
  %v106 = vunpack.c.h.b16 %v22
  %v107 = vunpack.c.l.b16 %v23
  %v108 = vunpack.c.h.b16 %v23
  %v109 = vunpack.c.l.b16 %v24
  %v110 = vunpack.c.h.b16 %v24
  %v111 = vunpack.c.l.b16 %v25
  %v112 = vunpack.c.h.b16 %v25
  %v113 = vunpack.c.l.b16 %v26
  %v114 = vunpack.c.h.b16 %v26
  %v115 = vunpack.c.l.b16 %v27
  %v116 = vunpack.c.h.b16 %v27
  %v117 = vunpack.c.l.b16 %v28
  %v118 = vunpack.c.h.b16 %v28
  %v119 = vunpack.c.l.b16 %v29
  %v120 = vunpack.c.h.b16 %v29
  %v121 = vunpack.c.l.b16 %v30
  %v122 = vunpack.c.h.b16 %v30
  %v123 = vunpack.c.l.b16 %v31
  %v124 = vunpack.c.h.b16 %v31
  %v125 = vunpack.c.l.b16 %v32
  %v126 = vunpack.c.h.b16 %v32
  %v127 = vunpack.c.l.b16 %v33
  %v128 = vunpack.c.h.b16 %v33
  %v129 = vunpack.c.l.b16 %v34
  %v130 = vunpack.c.h.b16 %v34
  %v131 = vunpack.c.l.b16 %v35
  %v132 = vunpack.c.h.b16 %v35
  %v133 = vunpack.c.l.b16 %v36
  %v134 = vunpack.c.h.b16 %v36
  %v135 = vunpack.c.l.b16 %v37
  %v136 = vunpack.c.h.b16 %v37
  %v137 = vunpack.c.l.b16 %v38
  %v138 = vunpack.c.h.b16 %v38
  %v139 = vunpack.c.l.b16 %v39
  %v140 = vunpack.c.h.b16 %v39
  %v141 = vunpack.c.l.b16 %v40
  %v142 = vunpack.c.h.b16 %v40
  %v143 = vunpack.c.l.b16 %v41
  %v144 = vunpack.c.h.b16 %v41
  %v145 = vunpack.c.l.b16 %v42
  %v146 = vunpack.c.h.b16 %v42
  %v147 = vunpack.c.l.b16 %v43
  %v148 = vunpack.c.h.b16 %v43
  %v149 = vunpack.c.l.b16 %v44
  %v150 = vunpack.c.h.b16 %v44
  %v151 = vunpack.c.l.b16 %v45
  %v152 = vunpack.c.h.b16 %v45
  %v153 = vunpack.c.l.b16 %v46
  %v154 = vunpack.c.h.b16 %v46
  %v155 = vunpack.c.l.b16 %v47
  %v156 = vunpack.c.h.b16 %v47
  %v157 = vunpack.c.l.b16 %v48
  %v158 = vunpack.c.h.b16 %v48
  %v159 = vunpack.c.l.b16 %v49
  %v160 = vunpack.c.h.b16 %v49
  %v161 = vunpack.c.l.b16 %v50
  %v162 = vunpack.c.h.b16 %v50
  %v163 = vunpack.c.l.b16 %v51
  %v164 = vunpack.c.h.b16 %v51
  %v165 = vunpack.c.l.b16 %v52
  %v166 = vunpack.c.h.b16 %v52
  %v167 = vunpack.c.l.b16 %v53
  %v168 = vunpack.c.h.b16 %v53
  %v169 = vunpack.c.l.b16 %v54
  %v170 = vunpack.c.h.b16 %v54
  %v171 = vunpack.c.l.b16 %v55
  %v172 = vunpack.c.h.b16 %v55
  %v173 = vpack.c.b16 %v105, %v101
  %v174 = vpack.c.b16 %v106, %v102
  %v175 = vpack.c.b16 %v107, %v103
  %v176 = vpack.c.b16 %v108, %v104
  %v177 = vpack.c.b16 %v113, %v109
  %v178 = vpack.c.b16 %v114, %v110
  %v179 = vpack.c.b16 %v115, %v111
  %v180 = vpack.c.b16 %v116, %v112
  %v181 = vpack.c.b16 %v121, %v117
  %v182 = vpack.c.b16 %v122, %v118
  %v183 = vpack.c.b16 %v123, %v119
  %v184 = vpack.c.b16 %v124, %v120
  %v185 = vpack.c.b16 %v129, %v125
  %v186 = vpack.c.b16 %v130, %v126
  %v187 = vpack.c.b16 %v131, %v127
  %v188 = vpack.c.b16 %v132, %v128
  %v189 = vpack.c.b16 %v137, %v133
  %v190 = vpack.c.b16 %v138, %v134
  %v191 = vpack.c.b16 %v139, %v135
  %v192 = vpack.c.b16 %v140, %v136
  %v193 = vpack.c.b16 %v145, %v141
  %v194 = vpack.c.b16 %v146, %v142
  %v195 = vpack.c.b16 %v147, %v143
  %v196 = vpack.c.b16 %v148, %v144
  %v197 = vpack.c.b16 %v153, %v149
  %v198 = vpack.c.b16 %v154, %v150
  %v199 = vpack.c.b16 %v155, %v151
  %v200 = vpack.c.b16 %v156, %v152
  %v201 = vpack.c.b16 %v161, %v157
  %v202 = vpack.c.b16 %v162, %v158
  %v203 = vpack.c.b16 %v163, %v159
  %v204 = vpack.c.b16 %v164, %v160
  %v205 = vpack.c.b16 %v169, %v165
  %v206 = vpack.c.b16 %v170, %v166
  %v207 = vpack.c.b16 %v171, %v167
  %v208 = vpack.c.b16 %v172, %v168
  %vm245 = vcmask 130048
  %v247 = vsel %vm245, %v63, 0
  %249 = vmatprep.subr.bf16.mxu0 %v174
  %250 = vmatpush1.bf16.msra.mxu0 %v173
  %251 = vmatprep.subr.bf16.mxu0 %v178
  %252 = vmatpush1.bf16.msra.mxu0 %v177
  %253 = vmatprep.subr.bf16.mxu0 %v182
  %254 = vmatpush1.bf16.msra.mxu0 %v181
  %255 = vmatprep.subr.bf16.mxu0 %v186
  %256 = vmatpush1.bf16.msra.mxu0 %v185
  %257 = vmatprep.subr.bf16.mxu0 %v190
  %258 = vmatpush1.bf16.msra.mxu0 %v189
  %259 = vmatprep.subr.bf16.mxu0 %v194
  %260 = vmatpush1.bf16.msra.mxu0 %v193
  %261 = vmatprep.subr.bf16.mxu0 %v198
  %262 = vmatpush1.bf16.msra.mxu0 %v197
  %263 = vmatprep.subr.bf16.mxu0 %v202
  %264 = vmatpush1.bf16.msra.mxu0 %v201
  %265 = vmatprep.subr.bf16.mxu0 %v206
  %266 = vmatpush1.bf16.msra.mxu0 %v205
  %267 = vmatprep.subr.bf16.mxu0 0
  %268 = vmatpush1.bf16.msra.mxu0 0
  %269 = vmatprep.subr.bf16.mxu0 0
  %270 = vmatpush1.bf16.msra.mxu0 0
  %271 = vmatprep.subr.bf16.mxu0 0
  %272 = vmatpush1.bf16.msra.mxu0 0
  %273 = vmatprep.subr.bf16.mxu0 0
  %274 = vmatpush1.bf16.msra.mxu0 0
  %275 = vmatprep.subr.bf16.mxu0 0
  %276 = vmatpush1.bf16.msra.mxu0 0
  %277 = vmatprep.subr.bf16.mxu0 0
  %278 = vmatpush1.bf16.msra.mxu0 0
  %279 = vmatprep.subr.bf16.mxu0 0
  %280 = vmatpush1.bf16.msra.mxu0 0
  %281 = vmatprep.mubr.bf16.mxu0 %v247
  %282 = vmatmul.mubr.bf16.gmra.mrb[0].mxu0 %v62
  %v283 = vpop.f32.mrb[0].mxu0
  %v284 = vadd.f32 0.0, %v283
  %v285 = vpop.f32.mrb[0].mxu0
  %v286 = vadd.f32 0.0, %v285
  %v287 = vpop.f32.mrb[0].mxu0
  %v288 = vadd.f32 0.0, %v287
  %v289 = vpop.f32.mrb[0].mxu0
  %v290 = vadd.f32 0.0, %v289
  %291 = vdwg.mxu0
  %292 = vmatprep.subr.bf16.mxu0 %v176
  %293 = vmatpush1.bf16.msra.mxu0 %v175
  %294 = vmatprep.subr.bf16.mxu0 %v180
  %295 = vmatpush1.bf16.msra.mxu0 %v179
  %296 = vmatprep.subr.bf16.mxu0 %v184
  %297 = vmatpush1.bf16.msra.mxu0 %v183
  %298 = vmatprep.subr.bf16.mxu0 %v188
  %299 = vmatpush1.bf16.msra.mxu0 %v187
  %300 = vmatprep.subr.bf16.mxu0 %v192
  %301 = vmatpush1.bf16.msra.mxu0 %v191
  %302 = vmatprep.subr.bf16.mxu0 %v196
  %303 = vmatpush1.bf16.msra.mxu0 %v195
  %304 = vmatprep.subr.bf16.mxu0 %v200
  %305 = vmatpush1.bf16.msra.mxu0 %v199
  %306 = vmatprep.subr.bf16.mxu0 %v204
  %307 = vmatpush1.bf16.msra.mxu0 %v203
  %308 = vmatprep.subr.bf16.mxu0 %v208
  %309 = vmatpush1.bf16.msra.mxu0 %v207
  %310 = vmatprep.subr.bf16.mxu0 0
  %311 = vmatpush1.bf16.msra.mxu0 0
  %312 = vmatprep.subr.bf16.mxu0 0
  %313 = vmatpush1.bf16.msra.mxu0 0
  %314 = vmatprep.subr.bf16.mxu0 0
  %315 = vmatpush1.bf16.msra.mxu0 0
  %316 = vmatprep.subr.bf16.mxu0 0
  %317 = vmatpush1.bf16.msra.mxu0 0
  %318 = vmatprep.subr.bf16.mxu0 0
  %319 = vmatpush1.bf16.msra.mxu0 0
  %320 = vmatprep.subr.bf16.mxu0 0
  %321 = vmatpush1.bf16.msra.mxu0 0
  %322 = vmatprep.subr.bf16.mxu0 0
  %323 = vmatpush1.bf16.msra.mxu0 0
  %324 = vmatprep.mubr.bf16.mxu0 %v247
  %325 = vmatmul.mubr.bf16.gmra.mrb[0].mxu0 %v62
  %v326 = vpop.f32.mrb[0].mxu0
  %v327 = vadd.f32 0.0, %v326
  %v328 = vpop.f32.mrb[0].mxu0
  %v329 = vadd.f32 0.0, %v328
  %v330 = vpop.f32.mrb[0].mxu0
  %v331 = vadd.f32 0.0, %v330
  %v332 = vpop.f32.mrb[0].mxu0
  %v333 = vadd.f32 0.0, %v332
  %334 = vdwg.mxu0
  %v335 = vld [vmem:[%s2] sm:$0xff]
  %v336 = vld [vmem:[%s2 + $0x8] sm:$0xff]
  %338 = vset.pattern.permute.xlu0 0
  %339 = vperm.xlu0 %338, %v335
  %v340 = vpop.permute.xlu0 %339
  %343 = vset.pattern.permute.xlu0 0
  %344 = vperm.xlu0 %343, %v336
  %v345 = vpop.permute.xlu0 %344
  %v347 = vmul.f32 %v284, %v340
  %v348 = vmul.f32 %v286, %v340
  %v349 = vmul.f32 %v327, %v340
  %v350 = vmul.f32 %v329, %v340
  %v351 = vmul.f32 %v288, %v345
  %v352 = vmul.f32 %v290, %v345
  %v353 = vmul.f32 %v331, %v345
  %v354 = vmul.f32 %v333, %v345
  %v355 = vld [vmem:[%s3] sm:$0xff]
  %v356 = vld [vmem:[%s3 + $0x8] sm:$0xff]
  %358 = vset.pattern.permute.xlu0 0
  %359 = vperm.xlu0 %358, %v355
  %v360 = vpop.permute.xlu0 %359
  %363 = vset.pattern.permute.xlu0 0
  %364 = vperm.xlu0 %363, %v356
  %v365 = vpop.permute.xlu0 %364
  %v367 = vadd.f32 %v347, %v360
  %v368 = vadd.f32 %v348, %v360
  %v369 = vadd.f32 %v349, %v360
  %v370 = vadd.f32 %v350, %v360
  %v371 = vadd.f32 %v351, %v365
  %v372 = vadd.f32 %v352, %v365
  %v373 = vadd.f32 %v353, %v365
  %v374 = vadd.f32 %v354, %v365
  %vm375 = vcmp.gt.f32.partialorder %v367, 0.0
  %vm376 = vcmp.gt.f32.partialorder %v368, 0.0
  %vm377 = vcmp.gt.f32.partialorder %v369, 0.0
  %vm378 = vcmp.gt.f32.partialorder %v370, 0.0
  %vm379 = vcmp.gt.f32.partialorder %v371, 0.0
  %vm380 = vcmp.gt.f32.partialorder %v372, 0.0
  %vm381 = vcmp.gt.f32.partialorder %v373, 0.0
  %vm382 = vcmp.gt.f32.partialorder %v374, 0.0
  %v383 = vmul.f32 %v367, 0.1
  %v384 = vmul.f32 %v368, 0.1
  %v385 = vmul.f32 %v369, 0.1
  %v386 = vmul.f32 %v370, 0.1
  %v387 = vmul.f32 %v371, 0.1
  %v388 = vmul.f32 %v372, 0.1
  %v389 = vmul.f32 %v373, 0.1
  %v390 = vmul.f32 %v374, 0.1
  %v391 = vsel %vm375, %v367, %v383
  %v392 = vsel %vm376, %v368, %v384
  %v393 = vsel %vm377, %v369, %v385
  %v394 = vsel %vm378, %v370, %v386
  %v395 = vsel %vm379, %v371, %v387
  %v396 = vsel %vm380, %v372, %v388
  %v397 = vsel %vm381, %v373, %v389
  %v398 = vsel %vm382, %v374, %v390
  %399 = vst [vmem:[%s4] sm:$0xff] %v391
  %400 = vst [vmem:[%s4 + $0x8] sm:$0xff] %v392
  %401 = vst [vmem:[%s4 + $0x10] sm:$0xff] %v393
  %402 = vst [vmem:[%s4 + $0x18] sm:$0xff] %v394
  %403 = vst [vmem:[%s4 + $0x20] sm:$0xff] %v395
  %404 = vst [vmem:[%s4 + $0x28] sm:$0xff] %v396
  %405 = vst [vmem:[%s4 + $0x30] sm:$0xff] %v397
  %406 = vst [vmem:[%s4 + $0x38] sm:$0xff] %v398
  // Predicated region
  $region18: #{_lambda_.16} parent=0 // pred_check
    _
  $region19: #{_lambda_.16} parent=0 // pred_check_branch
    %408 = sbr.rel (0) target = $region21
  $region20: #{_lambda_.16} parent=0 // pred_region
    _
  $region21: #{_lambda_.16} parent=0 // pred_fallthru
    _
  // Predicated region
  $region22: #{_lambda_.16} parent=0 // pred_check
    _
  $region23: #{_lambda_.16} parent=0 // pred_check_branch
    %410 = sbr.rel (0) target = $region25
  $region24: #{_lambda_.16} parent=0 // pred_region
    _
  $region25: #{_lambda_.16} parent=0 // pred_fallthru
    _

// kernel: _lambda_.17
$region0: #{_lambda_.17}
  #allocation0 [shape = 'u32[]', space=smem, size = 0x4, offset = 0x4, fixed_abs, tag = 'smem constant byte address 0x4 - core index']
  #allocation1 [shape = 'u32[144,128]{1,0:T(1,128)}', space=vmem, size = 0x12000, scoped, tag = 'internal scratch']
  %s0 = inlined_call_operand.vmem [shape: bf16[24,16], index: 0, kind: input, shape index: {}]
  %s1 = inlined_call_operand.vmem [shape: bf16[16,512], index: 1, kind: input, shape index: {}]
  %s2 = inlined_call_operand.vmem [shape: f32[24,1], index: 2, kind: input, shape index: {}]
  %s3 = inlined_call_operand.vmem [shape: f32[24,1], index: 3, kind: input, shape index: {}]
  %s4 = inlined_call_operand.vmem [shape: f32[24,1], index: 4, kind: input, shape index: {}]
  %s5 = inlined_call_operand.vmem [shape: f32[24,512], index: 5, kind: output, shape index: {}]
  %s6 = sld [smem:[#allocation0]]
  $region30: #{_lambda_.17} parent=0
    _
  %s8 = ssub.s32 1, %s6
  %s9 = scalar_select 0, %s8, %s6
  // Predicated region
  $region2: #{_lambda_.17} parent=0 // pred_check
    _
  $region3: #{_lambda_.17} parent=0 // pred_check_branch
    %11 = sbr.rel (0) target = $region5
  $region4: #{_lambda_.17} parent=0 // pred_region
    _
  $region5: #{_lambda_.17} parent=0 // pred_fallthru
    _
  // Predicated region
  $region6: #{_lambda_.17} parent=0 // pred_check
    _
  $region7: #{_lambda_.17} parent=0 // pred_check_branch
    %13 = sbr.rel (0) target = $region9
  $region8: #{_lambda_.17} parent=0 // pred_region
    _
  $region9: #{_lambda_.17} parent=0 // pred_fallthru
    _
  // Predicated region
  $region10: #{_lambda_.17} parent=0 // pred_check
    _
  $region11: #{_lambda_.17} parent=0 // pred_check_branch
    %15 = sbr.rel (0) target = $region13
  $region12: #{_lambda_.17} parent=0 // pred_region
    _
  $region13: #{_lambda_.17} parent=0 // pred_fallthru
    _
  // Predicated region
  $region14: #{_lambda_.17} parent=0 // pred_check
    _
  $region15: #{_lambda_.17} parent=0 // pred_check_branch
    %17 = sbr.rel (0) target = $region17
  $region16: #{_lambda_.17} parent=0 // pred_region
    _
  $region17: #{_lambda_.17} parent=0 // pred_fallthru
    _
  // Predicated region
  $region18: #{_lambda_.17} parent=0 // pred_check
    _
  $region19: #{_lambda_.17} parent=0 // pred_check_branch
    %19 = sbr.rel (0) target = $region21
  $region20: #{_lambda_.17} parent=0 // pred_region
    _
  $region21: #{_lambda_.17} parent=0 // pred_fallthru
    _
  %v21 = vld [vmem:[%s0] sm:$0xf]
  %v22 = vld [vmem:[%s0 + $0x4] sm:$0xf]
  %v23 = vld [vmem:[%s0 + $0x8] sm:$0xf]
  %v24 = vld [vmem:[%s1] sm:$0xff]
  %v25 = vld [vmem:[%s1 + $0x8] sm:$0xff]
  %v26 = vld [vmem:[%s1 + $0x10] sm:$0xff]
  %v27 = vld [vmem:[%s1 + $0x18] sm:$0xff]
  %v31 = vunpack.c.l.b16 %v21
  %v32 = vunpack.c.l.b16 %v22
  %v33 = vunpack.c.l.b16 %v23
  %v34 = vpack.c.b16 %v32, %v31
  %v35 = vpack.c.b16 %v33, %v33
  %v40 = vunpack.c.l.b16 %v24
  %v41 = vunpack.c.h.b16 %v24
  %v42 = vunpack.c.l.b16 %v25
  %v43 = vunpack.c.h.b16 %v25
  %v44 = vunpack.c.l.b16 %v26
  %v45 = vunpack.c.h.b16 %v26
  %v46 = vunpack.c.l.b16 %v27
  %v47 = vunpack.c.h.b16 %v27
  %v48 = vpack.c.b16 %v44, %v40
  %v49 = vpack.c.b16 %v45, %v41
  %v50 = vpack.c.b16 %v46, %v42
  %v51 = vpack.c.b16 %v47, %v43
  %vm56 = vcmask 130048
  %v58 = vsel %vm56, %v34, 0
  %v61 = vsel %vm56, %v35, 0
  %63 = vmatprep.subr.bf16.mxu0 %v49
  %64 = vmatpush1.bf16.msra.mxu0 %v48
  %65 = vmatprep.subr.bf16.mxu0 0
  %66 = vmatpush1.bf16.msra.mxu0 0
  %67 = vmatprep.subr.bf16.mxu0 0
  %68 = vmatpush1.bf16.msra.mxu0 0
  %69 = vmatprep.subr.bf16.mxu0 0
  %70 = vmatpush1.bf16.msra.mxu0 0
  %71 = vmatprep.subr.bf16.mxu0 0
  %72 = vmatpush1.bf16.msra.mxu0 0
  %73 = vmatprep.subr.bf16.mxu0 0
  %74 = vmatpush1.bf16.msra.mxu0 0
  %75 = vmatprep.subr.bf16.mxu0 0
  %76 = vmatpush1.bf16.msra.mxu0 0
  %77 = vmatprep.subr.bf16.mxu0 0
  %78 = vmatpush1.bf16.msra.mxu0 0
  %79 = vmatprep.subr.bf16.mxu0 0
  %80 = vmatpush1.bf16.msra.mxu0 0
  %81 = vmatprep.subr.bf16.mxu0 0
  %82 = vmatpush1.bf16.msra.mxu0 0
  %83 = vmatprep.subr.bf16.mxu0 0
  %84 = vmatpush1.bf16.msra.mxu0 0
  %85 = vmatprep.subr.bf16.mxu0 0
  %86 = vmatpush1.bf16.msra.mxu0 0
  %87 = vmatprep.subr.bf16.mxu0 0
  %88 = vmatpush1.bf16.msra.mxu0 0
  %89 = vmatprep.subr.bf16.mxu0 0
  %90 = vmatpush1.bf16.msra.mxu0 0
  %91 = vmatprep.subr.bf16.mxu0 0
  %92 = vmatpush1.bf16.msra.mxu0 0
  %93 = vmatprep.subr.bf16.mxu0 0
  %94 = vmatpush1.bf16.msra.mxu0 0
  %95 = vmatprep.mubr.bf16.mxu0 0
  %96 = vmatmul.mubr.bf16.gmra.mrb[0].mxu0 %v58
  %v97 = vpop.f32.mrb[0].mxu0
  %v98 = vadd.f32 0.0, %v97
  %v99 = vpop.f32.mrb[0].mxu0
  %v100 = vadd.f32 0.0, %v99
  %v101 = vpop.f32.mrb[0].mxu0
  %v102 = vadd.f32 0.0, %v101
  %v103 = vpop.f32.mrb[0].mxu0
  %v104 = vadd.f32 0.0, %v103
  %105 = vmatprep.mubr.bf16.mxu0 0
  %106 = vmatmul.mubr.bf16.gmra.mrb[0].mxu0 %v61
  %v107 = vpop.f32.mrb[0].mxu0
  %v108 = vadd.f32 0.0, %v107
  %v109 = vpop.f32.mrb[0].mxu0
  %v110 = vadd.f32 0.0, %v109
  %v111 = vpop.f32.mrb[0].mxu0
  %v112 = vpop.f32.mrb[0].mxu0
  %113 = vdwg.mxu0
  %114 = vmatprep.subr.bf16.mxu0 %v51
  %115 = vmatpush1.bf16.msra.mxu0 %v50
  %116 = vmatprep.subr.bf16.mxu0 0
  %117 = vmatpush1.bf16.msra.mxu0 0
  %118 = vmatprep.subr.bf16.mxu0 0
  %119 = vmatpush1.bf16.msra.mxu0 0
  %120 = vmatprep.subr.bf16.mxu0 0
  %121 = vmatpush1.bf16.msra.mxu0 0
  %122 = vmatprep.subr.bf16.mxu0 0
  %123 = vmatpush1.bf16.msra.mxu0 0
  %124 = vmatprep.subr.bf16.mxu0 0
  %125 = vmatpush1.bf16.msra.mxu0 0
  %126 = vmatprep.subr.bf16.mxu0 0
  %127 = vmatpush1.bf16.msra.mxu0 0
  %128 = vmatprep.subr.bf16.mxu0 0
  %129 = vmatpush1.bf16.msra.mxu0 0
  %130 = vmatprep.subr.bf16.mxu0 0
  %131 = vmatpush1.bf16.msra.mxu0 0
  %132 = vmatprep.subr.bf16.mxu0 0
  %133 = vmatpush1.bf16.msra.mxu0 0
  %134 = vmatprep.subr.bf16.mxu0 0
  %135 = vmatpush1.bf16.msra.mxu0 0
  %136 = vmatprep.subr.bf16.mxu0 0
  %137 = vmatpush1.bf16.msra.mxu0 0
  %138 = vmatprep.subr.bf16.mxu0 0
  %139 = vmatpush1.bf16.msra.mxu0 0
  %140 = vmatprep.subr.bf16.mxu0 0
  %141 = vmatpush1.bf16.msra.mxu0 0
  %142 = vmatprep.subr.bf16.mxu0 0
  %143 = vmatpush1.bf16.msra.mxu0 0
  %144 = vmatprep.subr.bf16.mxu0 0
  %145 = vmatpush1.bf16.msra.mxu0 0
  %146 = vmatprep.mubr.bf16.mxu0 0
  %147 = vmatmul.mubr.bf16.gmra.mrb[0].mxu0 %v58
  %v148 = vpop.f32.mrb[0].mxu0
  %v149 = vadd.f32 0.0, %v148
  %v150 = vpop.f32.mrb[0].mxu0
  %v151 = vadd.f32 0.0, %v150
  %v152 = vpop.f32.mrb[0].mxu0
  %v153 = vadd.f32 0.0, %v152
  %v154 = vpop.f32.mrb[0].mxu0
  %v155 = vadd.f32 0.0, %v154
  %156 = vmatprep.mubr.bf16.mxu0 0
  %157 = vmatmul.mubr.bf16.gmra.mrb[0].mxu0 %v61
  %v158 = vpop.f32.mrb[0].mxu0
  %v159 = vadd.f32 0.0, %v158
  %v160 = vpop.f32.mrb[0].mxu0
  %v161 = vadd.f32 0.0, %v160
  %v162 = vpop.f32.mrb[0].mxu0
  %v163 = vpop.f32.mrb[0].mxu0
  %164 = vdwg.mxu0
  %v165 = vld [vmem:[%s2] sm:$0xff]
  %v166 = vld [vmem:[%s2 + $0x8] sm:$0xff]
  %v167 = vld [vmem:[%s2 + $0x10] sm:$0xff]
  %169 = vset.pattern.permute.xlu0 0
  %170 = vperm.xlu0 %169, %v165
  %v171 = vpop.permute.xlu0 %170
  %174 = vset.pattern.permute.xlu0 0
  %175 = vperm.xlu0 %174, %v166
  %v176 = vpop.permute.xlu0 %175
  %179 = vset.pattern.permute.xlu0 0
  %180 = vperm.xlu0 %179, %v167
  %v181 = vpop.permute.xlu0 %180
  %v183 = vmul.f32 %v98, %v171
  %v184 = vmul.f32 %v100, %v171
  %v185 = vmul.f32 %v149, %v171
  %v186 = vmul.f32 %v151, %v171
  %v187 = vmul.f32 %v102, %v176
  %v188 = vmul.f32 %v104, %v176
  %v189 = vmul.f32 %v153, %v176
  %v190 = vmul.f32 %v155, %v176
  %v191 = vmul.f32 %v108, %v181
  %v192 = vmul.f32 %v110, %v181
  %v193 = vmul.f32 %v159, %v181
  %v194 = vmul.f32 %v161, %v181
  %v195 = vld [vmem:[%s3] sm:$0xff]
  %v196 = vld [vmem:[%s3 + $0x8] sm:$0xff]
  %v197 = vld [vmem:[%s3 + $0x10] sm:$0xff]
  %199 = vset.pattern.permute.xlu0 0
  %200 = vperm.xlu0 %199, %v195
  %v201 = vpop.permute.xlu0 %200
  %204 = vset.pattern.permute.xlu0 0
  %205 = vperm.xlu0 %204, %v196
  %v206 = vpop.permute.xlu0 %205
  %209 = vset.pattern.permute.xlu0 0
  %210 = vperm.xlu0 %209, %v197
  %v211 = vpop.permute.xlu0 %210
  %v213 = vadd.f32 %v183, %v201
  %v214 = vadd.f32 %v184, %v201
  %v215 = vadd.f32 %v185, %v201
  %v216 = vadd.f32 %v186, %v201
  %v217 = vadd.f32 %v187, %v206
  %v218 = vadd.f32 %v188, %v206
  %v219 = vadd.f32 %v189, %v206
  %v220 = vadd.f32 %v190, %v206
  %v221 = vadd.f32 %v191, %v211
  %v222 = vadd.f32 %v192, %v211
  %v223 = vadd.f32 %v193, %v211
  %v224 = vadd.f32 %v194, %v211
  %v225 = vld [vmem:[%s4] sm:$0xff]
  %v226 = vld [vmem:[%s4 + $0x8] sm:$0xff]
  %v227 = vld [vmem:[%s4 + $0x10] sm:$0xff]
  %v228 = vlaneseq
  %v229 = vand.u32 %v228, 127
  %v230 = vadd.s32 %v229, 128
  %v231 = vadd.s32 %v229, 256
  %v232 = vadd.s32 %v229, 384
  %v233 = vcvt.s32.f32 %v229
  %v234 = vcvt.s32.f32 %v230
  %v235 = vcvt.s32.f32 %v231
  %v236 = vcvt.s32.f32 %v232
  %v237 = vlaneseq
  %v238 = vshrl.u32 %v237, 7
  %v239 = vadd.s32 %v238, 8
  %v240 = vadd.s32 %v238, 16
  %v241 = vcvt.s32.f32 %v238
  %v242 = vcvt.s32.f32 %v239
  %v243 = vcvt.s32.f32 %v240
  %v244 = vrcp.pop 256.0
  %v245 = vmul.f32 %v233, %v244
  %v246 = vmul.f32 %v234, %v244
  %v247 = vmul.f32 %v235, %v244
  %v248 = vmul.f32 %v236, %v244
  %v249 = vadd.f32 %v245, 0.0001
  %v250 = vadd.f32 %v246, 0.0001
  %v251 = vadd.f32 %v247, 0.0001
  %v252 = vadd.f32 %v248, 0.0001
  %v253 = vfloor.f32 %v249
  %v254 = vfloor.f32 %v250
  %v255 = vfloor.f32 %v251
  %v256 = vfloor.f32 %v252
  %v257 = vmul.f32 %v253, 256.0
  %v258 = vmul.f32 %v254, 256.0
  %v259 = vmul.f32 %v255, 256.0
  %v260 = vmul.f32 %v256, 256.0
  %v261 = vsub.f32 %v233, %v257
  %v262 = vsub.f32 %v234, %v258
  %v263 = vsub.f32 %v235, %v259
  %v264 = vsub.f32 %v236, %v260
  %v265 = vrcp.pop 16.0
  %v266 = vmul.f32 %v261, %v265
  %v267 = vmul.f32 %v262, %v265
  %v268 = vmul.f32 %v263, %v265
  %v269 = vmul.f32 %v264, %v265
  %v270 = vadd.f32 %v266, 0.0001
  %v271 = vadd.f32 %v267, 0.0001
  %v272 = vadd.f32 %v268, 0.0001
  %v273 = vadd.f32 %v269, 0.0001
  %v274 = vfloor.f32 %v270
  %v275 = vfloor.f32 %v271
  %v276 = vfloor.f32 %v272
  %v277 = vfloor.f32 %v273
  %v278 = vmul.f32 %v274, 16.0
  %v279 = vmul.f32 %v275, 16.0
  %v280 = vmul.f32 %v276, 16.0
  %v281 = vmul.f32 %v277, 16.0
  %v282 = vsub.f32 %v261, %v278
  %v283 = vsub.f32 %v262, %v279
  %v284 = vsub.f32 %v263, %v280
  %v285 = vsub.f32 %v264, %v281
  %v286 = vrcp.pop 8.0
  %v287 = vmul.f32 %v241, %v286
  %v288 = vmul.f32 %v242, %v286
  %v289 = vmul.f32 %v243, %v286
  %v290 = vadd.f32 %v287, 0.0001
  %v291 = vadd.f32 %v288, 0.0001
  %v292 = vadd.f32 %v289, 0.0001
  %v293 = vfloor.f32 %v290
  %v294 = vfloor.f32 %v291
  %v295 = vfloor.f32 %v292
  %v296 = vmul.f32 %v293, 8.0
  %v297 = vmul.f32 %v294, 8.0
  %v298 = vmul.f32 %v295, 8.0
  %v299 = vsub.f32 %v241, %v296
  %v300 = vsub.f32 %v242, %v297
  %v301 = vsub.f32 %v243, %v298
  %v302 = vxor.u32 %v213, 2147483648
  %v303 = vxor.u32 %v214, 2147483648
  %v304 = vxor.u32 %v215, 2147483648
  %v305 = vxor.u32 %v216, 2147483648
  %v306 = vxor.u32 %v217, 2147483648
  %v307 = vxor.u32 %v218, 2147483648
  %v308 = vxor.u32 %v219, 2147483648
  %v309 = vxor.u32 %v220, 2147483648
  %v310 = vxor.u32 %v221, 2147483648
  %v311 = vxor.u32 %v222, 2147483648
  %v312 = vxor.u32 %v223, 2147483648
  %v313 = vxor.u32 %v224, 2147483648
  %v314 = vmul.f32 %v302, 1.442695
  %v315 = vpow.pop %v314
  %v316 = vmul.f32 %v303, 1.442695
  %v317 = vpow.pop %v316
  %v318 = vmul.f32 %v304, 1.442695
  %v319 = vpow.pop %v318
  %v320 = vmul.f32 %v305, 1.442695
  %v321 = vpow.pop %v320
  %v322 = vmul.f32 %v306, 1.442695
  %v323 = vpow.pop %v322
  %v324 = vmul.f32 %v307, 1.442695
  %v325 = vpow.pop %v324
  %v326 = vmul.f32 %v308, 1.442695
  %v327 = vpow.pop %v326
  %v328 = vmul.f32 %v309, 1.442695
  %v329 = vpow.pop %v328
  %v330 = vmul.f32 %v310, 1.442695
  %v331 = vpow.pop %v330
  %v332 = vmul.f32 %v311, 1.442695
  %v333 = vpow.pop %v332
  %v334 = vmul.f32 %v312, 1.442695
  %v335 = vpow.pop %v334
  %v336 = vmul.f32 %v313, 1.442695
  %v337 = vpow.pop %v336
  %v338 = vadd.f32 %v315, 1.0
  %v339 = vadd.f32 %v317, 1.0
  %v340 = vadd.f32 %v319, 1.0
  %v341 = vadd.f32 %v321, 1.0
  %v342 = vadd.f32 %v323, 1.0
  %v343 = vadd.f32 %v325, 1.0
  %v344 = vadd.f32 %v327, 1.0
  %v345 = vadd.f32 %v329, 1.0
  %v346 = vadd.f32 %v331, 1.0
  %v347 = vadd.f32 %v333, 1.0
  %v348 = vadd.f32 %v335, 1.0
  %v349 = vadd.f32 %v337, 1.0
  %v350 = vrcp.pop %v338
  %v351 = vmul.f32 1.0, %v350
  %v352 = vrcp.pop %v339
  %v353 = vmul.f32 1.0, %v352
  %v354 = vrcp.pop %v340
  %v355 = vmul.f32 1.0, %v354
  %v356 = vrcp.pop %v341
  %v357 = vmul.f32 1.0, %v356
  %v358 = vrcp.pop %v342
  %v359 = vmul.f32 1.0, %v358
  %v360 = vrcp.pop %v343
  %v361 = vmul.f32 1.0, %v360
  %v362 = vrcp.pop %v344
  %v363 = vmul.f32 1.0, %v362
  %v364 = vrcp.pop %v345
  %v365 = vmul.f32 1.0, %v364
  %v366 = vrcp.pop %v346
  %v367 = vmul.f32 1.0, %v366
  %v368 = vrcp.pop %v347
  %v369 = vmul.f32 1.0, %v368
  %v370 = vrcp.pop %v348
  %v371 = vmul.f32 1.0, %v370
  %v372 = vrcp.pop %v349
  %v373 = vmul.f32 1.0, %v372
  %vm374 = vcmp.lt.f32.partialorder %v299, 0.5
  %vm375 = vcmp.lt.f32.partialorder %v300, 0.5
  %vm376 = vcmp.lt.f32.partialorder %v301, 0.5
  %v377 = vsel %vm374, %v282, %v274
  %v378 = vsel %vm374, %v283, %v275
  %v379 = vsel %vm374, %v284, %v276
  %v380 = vsel %vm374, %v285, %v277
  %v381 = vsel %vm375, %v282, %v274
  %v382 = vsel %vm375, %v283, %v275
  %v383 = vsel %vm375, %v284, %v276
  %v384 = vsel %vm375, %v285, %v277
  %v385 = vsel %vm376, %v282, %v274
  %v386 = vsel %vm376, %v283, %v275
  %v387 = vsel %vm376, %v284, %v276
  %v388 = vsel %vm376, %v285, %v277
  %v389 = vadd.f32 %v351, %v377
  %v390 = vadd.f32 %v353, %v378
  %v391 = vadd.f32 %v355, %v379
  %v392 = vadd.f32 %v357, %v380
  %v393 = vadd.f32 %v359, %v381
  %v394 = vadd.f32 %v361, %v382
  %v395 = vadd.f32 %v363, %v383
  %v396 = vadd.f32 %v365, %v384
  %v397 = vadd.f32 %v367, %v385
  %v398 = vadd.f32 %v369, %v386
  %v399 = vadd.f32 %v371, %v387
  %v400 = vadd.f32 %v373, %v388
  %vm401 = vcmp.gt.f32.partialorder %v299, 1.5
  %vm402 = vcmp.gt.f32.partialorder %v300, 1.5
  %vm403 = vcmp.gt.f32.partialorder %v301, 1.5
  %vm404 = vcmp.lt.f32.partialorder %v299, 3.5
  %vm405 = vcmp.lt.f32.partialorder %v300, 3.5
  %vm406 = vcmp.lt.f32.partialorder %v301, 3.5
  %vm407 = vmand %vm401, %vm404
  %vm408 = vmand %vm402, %vm405
  %vm409 = vmand %vm403, %vm406
  %v410 = vsel %vm407, %v213, 0.0
  %v411 = vsel %vm407, %v214, 0.0
  %v412 = vsel %vm407, %v215, 0.0
  %v413 = vsel %vm407, %v216, 0.0
  %v414 = vsel %vm408, %v217, 0.0
  %v415 = vsel %vm408, %v218, 0.0
  %v416 = vsel %vm408, %v219, 0.0
  %v417 = vsel %vm408, %v220, 0.0
  %v418 = vsel %vm409, %v221, 0.0
  %v419 = vsel %vm409, %v222, 0.0
  %v420 = vsel %vm409, %v223, 0.0
  %v421 = vsel %vm409, %v224, 0.0
  %v422 = vmul.f32 %v410, 1.442695
  %v423 = vpow.pop %v422
  %v424 = vmul.f32 %v411, 1.442695
  %v425 = vpow.pop %v424
  %v426 = vmul.f32 %v412, 1.442695
  %v427 = vpow.pop %v426
  %v428 = vmul.f32 %v413, 1.442695
  %v429 = vpow.pop %v428
  %v430 = vmul.f32 %v414, 1.442695
  %v431 = vpow.pop %v430
  %v432 = vmul.f32 %v415, 1.442695
  %v433 = vpow.pop %v432
  %v434 = vmul.f32 %v416, 1.442695
  %v435 = vpow.pop %v434
  %v436 = vmul.f32 %v417, 1.442695
  %v437 = vpow.pop %v436
  %v438 = vmul.f32 %v418, 1.442695
  %v439 = vpow.pop %v438
  %v440 = vmul.f32 %v419, 1.442695
  %v441 = vpow.pop %v440
  %v442 = vmul.f32 %v420, 1.442695
  %v443 = vpow.pop %v442
  %v444 = vmul.f32 %v421, 1.442695
  %v445 = vpow.pop %v444
  %447 = vset.pattern.permute.xlu0 0
  %448 = vperm.xlu0 %447, %v225
  %v449 = vpop.permute.xlu0 %448
  %452 = vset.pattern.permute.xlu0 0
  %453 = vperm.xlu0 %452, %v226
  %v454 = vpop.permute.xlu0 %453
  %457 = vset.pattern.permute.xlu0 0
  %458 = vperm.xlu0 %457, %v227
  %v459 = vpop.permute.xlu0 %458
  %v461 = vmul.f32 %v423, %v449
  %v462 = vmul.f32 %v425, %v449
  %v463 = vmul.f32 %v427, %v449
  %v464 = vmul.f32 %v429, %v449
  %v465 = vmul.f32 %v431, %v454
  %v466 = vmul.f32 %v433, %v454
  %v467 = vmul.f32 %v435, %v454
  %v468 = vmul.f32 %v437, %v454
  %v469 = vmul.f32 %v439, %v459
  %v470 = vmul.f32 %v441, %v459
  %v471 = vmul.f32 %v443, %v459
  %v472 = vmul.f32 %v445, %v459
  %vm473 = vcmp.lt.f32.partialorder %v299, 1.5
  %vm474 = vcmp.lt.f32.partialorder %v300, 1.5
  %vm475 = vcmp.lt.f32.partialorder %v301, 1.5
  %v476 = vsel %vm404, %v461, %v351
  %v477 = vsel %vm404, %v462, %v353
  %v478 = vsel %vm404, %v463, %v355
  %v479 = vsel %vm404, %v464, %v357
  %v480 = vsel %vm405, %v465, %v359
  %v481 = vsel %vm405, %v466, %v361
  %v482 = vsel %vm405, %v467, %v363
  %v483 = vsel %vm405, %v468, %v365
  %v484 = vsel %vm406, %v469, %v367
  %v485 = vsel %vm406, %v470, %v369
  %v486 = vsel %vm406, %v471, %v371
  %v487 = vsel %vm406, %v472, %v373
  %v488 = vsel %vm473, %v389, %v476
  %v489 = vsel %vm473, %v390, %v477
  %v490 = vsel %vm473, %v391, %v478
  %v491 = vsel %vm473, %v392, %v479
  %v492 = vsel %vm474, %v393, %v480
  %v493 = vsel %vm474, %v394, %v481
  %v494 = vsel %vm474, %v395, %v482
  %v495 = vsel %vm474, %v396, %v483
  %v496 = vsel %vm475, %v397, %v484
  %v497 = vsel %vm475, %v398, %v485
  %v498 = vsel %vm475, %v399, %v486
  %v499 = vsel %vm475, %v400, %v487
  %500 = vst [vmem:[%s5] sm:$0xff] %v488
  %501 = vst [vmem:[%s5 + $0x8] sm:$0xff] %v489
  %502 = vst [vmem:[%s5 + $0x10] sm:$0xff] %v490
  %503 = vst [vmem:[%s5 + $0x18] sm:$0xff] %v491
  %504 = vst [vmem:[%s5 + $0x20] sm:$0xff] %v492
  %505 = vst [vmem:[%s5 + $0x28] sm:$0xff] %v493
  %506 = vst [vmem:[%s5 + $0x30] sm:$0xff] %v494
  %507 = vst [vmem:[%s5 + $0x38] sm:$0xff] %v495
  %508 = vst [vmem:[%s5 + $0x40] sm:$0xff] %v496
  %509 = vst [vmem:[%s5 + $0x48] sm:$0xff] %v497
  %510 = vst [vmem:[%s5 + $0x50] sm:$0xff] %v498
  %511 = vst [vmem:[%s5 + $0x58] sm:$0xff] %v499
  // Predicated region
  $region22: #{_lambda_.17} parent=0 // pred_check
    _
  $region23: #{_lambda_.17} parent=0 // pred_check_branch
    %513 = sbr.rel (0) target = $region25
  $region24: #{_lambda_.17} parent=0 // pred_region
    _
  $region25: #{_lambda_.17} parent=0 // pred_fallthru
    _
  // Predicated region
  $region26: #{_lambda_.17} parent=0 // pred_check
    _
  $region27: #{_lambda_.17} parent=0 // pred_check_branch
    %515 = sbr.rel (0) target = $region29
  $region28: #{_lambda_.17} parent=0 // pred_region
    _
  $region29: #{_lambda_.17} parent=0 // pred_fallthru
    _

// kernel: _lambda_.14
$region0: #{_lambda_.14}
  #allocation0 [shape = 'u32[]', space=smem, size = 0x4, offset = 0x4, fixed_abs, tag = 'smem constant byte address 0x4 - core index']
  #allocation1 [shape = 'u32[144,128]{1,0:T(1,128)}', space=vmem, size = 0x12000, scoped, tag = 'internal scratch']
  %s0 = inlined_call_operand.vmem [shape: bf16[24,16], index: 0, kind: input, shape index: {}]
  %s1 = inlined_call_operand.vmem [shape: bf16[16,128], index: 1, kind: input, shape index: {}]
  %s2 = inlined_call_operand.vmem [shape: f32[24,1], index: 2, kind: input, shape index: {}]
  %s3 = inlined_call_operand.vmem [shape: f32[24,1], index: 3, kind: input, shape index: {}]
  %s4 = inlined_call_operand.vmem [shape: f32[24,1], index: 4, kind: input, shape index: {}]
  %s5 = inlined_call_operand.vmem [shape: f32[24,128], index: 5, kind: output, shape index: {}]
  %s6 = sld [smem:[#allocation0]]
  $region30: #{_lambda_.14} parent=0
    _
  %s8 = ssub.s32 1, %s6
  %s9 = scalar_select 0, %s8, %s6
  // Predicated region
  $region2: #{_lambda_.14} parent=0 // pred_check
    _
  $region3: #{_lambda_.14} parent=0 // pred_check_branch
    %11 = sbr.rel (0) target = $region5
  $region4: #{_lambda_.14} parent=0 // pred_region
    _
  $region5: #{_lambda_.14} parent=0 // pred_fallthru
    _
  // Predicated region
  $region6: #{_lambda_.14} parent=0 // pred_check
    _
  $region7: #{_lambda_.14} parent=0 // pred_check_branch
    %13 = sbr.rel (0) target = $region9
  $region8: #{_lambda_.14} parent=0 // pred_region
    _
  $region9: #{_lambda_.14} parent=0 // pred_fallthru
    _
  // Predicated region
  $region10: #{_lambda_.14} parent=0 // pred_check
    _
  $region11: #{_lambda_.14} parent=0 // pred_check_branch
    %15 = sbr.rel (0) target = $region13
  $region12: #{_lambda_.14} parent=0 // pred_region
    _
  $region13: #{_lambda_.14} parent=0 // pred_fallthru
    _
  // Predicated region
  $region14: #{_lambda_.14} parent=0 // pred_check
    _
  $region15: #{_lambda_.14} parent=0 // pred_check_branch
    %17 = sbr.rel (0) target = $region17
  $region16: #{_lambda_.14} parent=0 // pred_region
    _
  $region17: #{_lambda_.14} parent=0 // pred_fallthru
    _
  // Predicated region
  $region18: #{_lambda_.14} parent=0 // pred_check
    _
  $region19: #{_lambda_.14} parent=0 // pred_check_branch
    %19 = sbr.rel (0) target = $region21
  $region20: #{_lambda_.14} parent=0 // pred_region
    _
  $region21: #{_lambda_.14} parent=0 // pred_fallthru
    _
  %v21 = vld [vmem:[%s0] sm:$0xf]
  %v22 = vld [vmem:[%s0 + $0x4] sm:$0xf]
  %v23 = vld [vmem:[%s0 + $0x8] sm:$0xf]
  %v24 = vld [vmem:[%s1] sm:$0xf]
  %v25 = vld [vmem:[%s1 + $0x4] sm:$0xf]
  %v29 = vunpack.c.l.b16 %v21
  %v30 = vunpack.c.l.b16 %v22
  %v31 = vunpack.c.l.b16 %v23
  %v32 = vpack.c.b16 %v30, %v29
  %v33 = vpack.c.b16 %v31, %v31
  %v36 = vunpack.c.l.b16 %v24
  %v37 = vunpack.c.l.b16 %v25
  %v38 = vpack.c.b16 %v37, %v36
  %vm40 = vcmask 130048
  %v42 = vsel %vm40, %v32, 0
  %v45 = vsel %vm40, %v33, 0
  %47 = vmatprep.subr.bf16.mxu0 0
  %48 = vmatpush1.bf16.msra.mxu0 %v38
  %49 = vmatprep.subr.bf16.mxu0 0
  %50 = vmatpush1.bf16.msra.mxu0 0
  %51 = vmatprep.subr.bf16.mxu0 0
  %52 = vmatpush1.bf16.msra.mxu0 0
  %53 = vmatprep.subr.bf16.mxu0 0
  %54 = vmatpush1.bf16.msra.mxu0 0
  %55 = vmatprep.subr.bf16.mxu0 0
  %56 = vmatpush1.bf16.msra.mxu0 0
  %57 = vmatprep.subr.bf16.mxu0 0
  %58 = vmatpush1.bf16.msra.mxu0 0
  %59 = vmatprep.subr.bf16.mxu0 0
  %60 = vmatpush1.bf16.msra.mxu0 0
  %61 = vmatprep.subr.bf16.mxu0 0
  %62 = vmatpush1.bf16.msra.mxu0 0
  %63 = vmatprep.subr.bf16.mxu0 0
  %64 = vmatpush1.bf16.msra.mxu0 0
  %65 = vmatprep.subr.bf16.mxu0 0
  %66 = vmatpush1.bf16.msra.mxu0 0
  %67 = vmatprep.subr.bf16.mxu0 0
  %68 = vmatpush1.bf16.msra.mxu0 0
  %69 = vmatprep.subr.bf16.mxu0 0
  %70 = vmatpush1.bf16.msra.mxu0 0
  %71 = vmatprep.subr.bf16.mxu0 0
  %72 = vmatpush1.bf16.msra.mxu0 0
  %73 = vmatprep.subr.bf16.mxu0 0
  %74 = vmatpush1.bf16.msra.mxu0 0
  %75 = vmatprep.subr.bf16.mxu0 0
  %76 = vmatpush1.bf16.msra.mxu0 0
  %77 = vmatprep.subr.bf16.mxu0 0
  %78 = vmatpush1.bf16.msra.mxu0 0
  %79 = vmatprep.mubr.bf16.mxu0 0
  %80 = vmatmul.mubr.bf16.gmra.mrb[0].mxu0 %v42
  %v81 = vpop.f32.mrb[0].mxu0
  %v82 = vadd.f32 0.0, %v81
  %v83 = vpop.f32.mrb[0].mxu0
  %v84 = vpop.f32.mrb[0].mxu0
  %v85 = vadd.f32 0.0, %v84
  %v86 = vpop.f32.mrb[0].mxu0
  %87 = vmatprep.mubr.bf16.mxu0 0
  %88 = vmatmul.mubr.bf16.gmra.mrb[0].mxu0 %v45
  %v89 = vpop.f32.mrb[0].mxu0
  %v90 = vadd.f32 0.0, %v89
  %v91 = vpop.f32.mrb[0].mxu0
  %v92 = vpop.f32.mrb[0].mxu0
  %v93 = vpop.f32.mrb[0].mxu0
  %94 = vdwg.mxu0
  %v95 = vld [vmem:[%s2] sm:$0xff]
  %v96 = vld [vmem:[%s2 + $0x8] sm:$0xff]
  %v97 = vld [vmem:[%s2 + $0x10] sm:$0xff]
  %99 = vset.pattern.permute.xlu0 0
  %100 = vperm.xlu0 %99, %v95
  %v101 = vpop.permute.xlu0 %100
  %104 = vset.pattern.permute.xlu0 0
  %105 = vperm.xlu0 %104, %v96
  %v106 = vpop.permute.xlu0 %105
  %109 = vset.pattern.permute.xlu0 0
  %110 = vperm.xlu0 %109, %v97
  %v111 = vpop.permute.xlu0 %110
  %v113 = vmul.f32 %v82, %v101
  %v114 = vmul.f32 %v85, %v106
  %v115 = vmul.f32 %v90, %v111
  %v116 = vld [vmem:[%s3] sm:$0xff]
  %v117 = vld [vmem:[%s3 + $0x8] sm:$0xff]
  %v118 = vld [vmem:[%s3 + $0x10] sm:$0xff]
  %120 = vset.pattern.permute.xlu0 0
  %121 = vperm.xlu0 %120, %v116
  %v122 = vpop.permute.xlu0 %121
  %125 = vset.pattern.permute.xlu0 0
  %126 = vperm.xlu0 %125, %v117
  %v127 = vpop.permute.xlu0 %126
  %130 = vset.pattern.permute.xlu0 0
  %131 = vperm.xlu0 %130, %v118
  %v132 = vpop.permute.xlu0 %131
  %v134 = vadd.f32 %v113, %v122
  %v135 = vadd.f32 %v114, %v127
  %v136 = vadd.f32 %v115, %v132
  %v137 = vld [vmem:[%s4] sm:$0xff]
  %v138 = vld [vmem:[%s4 + $0x8] sm:$0xff]
  %v139 = vld [vmem:[%s4 + $0x10] sm:$0xff]
  %v140 = vlaneseq
  %v141 = vand.u32 %v140, 127
  %v142 = vcvt.s32.f32 %v141
  %v143 = vlaneseq
  %v144 = vshrl.u32 %v143, 7
  %v145 = vadd.s32 %v144, 8
  %v146 = vadd.s32 %v144, 16
  %v147 = vcvt.s32.f32 %v144
  %v148 = vcvt.s32.f32 %v145
  %v149 = vcvt.s32.f32 %v146
  %v150 = vrcp.pop 64.0
  %v151 = vmul.f32 %v142, %v150
  %v152 = vadd.f32 %v151, 0.0001
  %v153 = vfloor.f32 %v152
  %v154 = vmul.f32 %v153, 64.0
  %v155 = vsub.f32 %v142, %v154
  %v156 = vrcp.pop 8.0
  %v157 = vmul.f32 %v155, %v156
  %v158 = vadd.f32 %v157, 0.0001
  %v159 = vfloor.f32 %v158
  %v160 = vmul.f32 %v159, 8.0
  %v161 = vsub.f32 %v155, %v160
  %v162 = vmul.f32 %v147, %v156
  %v163 = vmul.f32 %v148, %v156
  %v164 = vmul.f32 %v149, %v156
  %v165 = vadd.f32 %v162, 0.0001
  %v166 = vadd.f32 %v163, 0.0001
  %v167 = vadd.f32 %v164, 0.0001
  %v168 = vfloor.f32 %v165
  %v169 = vfloor.f32 %v166
  %v170 = vfloor.f32 %v167
  %v171 = vmul.f32 %v168, 8.0
  %v172 = vmul.f32 %v169, 8.0
  %v173 = vmul.f32 %v170, 8.0
  %v174 = vsub.f32 %v147, %v171
  %v175 = vsub.f32 %v148, %v172
  %v176 = vsub.f32 %v149, %v173
  %v177 = vxor.u32 %v134, 2147483648
  %v178 = vxor.u32 %v135, 2147483648
  %v179 = vxor.u32 %v136, 2147483648
  %v180 = vmul.f32 %v177, 1.442695
  %v181 = vpow.pop %v180
  %v182 = vmul.f32 %v178, 1.442695
  %v183 = vpow.pop %v182
  %v184 = vmul.f32 %v179, 1.442695
  %v185 = vpow.pop %v184
  %v186 = vadd.f32 %v181, 1.0
  %v187 = vadd.f32 %v183, 1.0
  %v188 = vadd.f32 %v185, 1.0
  %v189 = vrcp.pop %v186
  %v190 = vmul.f32 1.0, %v189
  %v191 = vrcp.pop %v187
  %v192 = vmul.f32 1.0, %v191
  %v193 = vrcp.pop %v188
  %v194 = vmul.f32 1.0, %v193
  %vm195 = vcmp.lt.f32.partialorder %v174, 0.5
  %vm196 = vcmp.lt.f32.partialorder %v175, 0.5
  %vm197 = vcmp.lt.f32.partialorder %v176, 0.5
  %v198 = vsel %vm195, %v161, %v159
  %v199 = vsel %vm196, %v161, %v159
  %v200 = vsel %vm197, %v161, %v159
  %v201 = vadd.f32 %v190, %v198
  %v202 = vadd.f32 %v192, %v199
  %v203 = vadd.f32 %v194, %v200
  %v204 = vmul.f32 %v201, 2.0
  %v205 = vmul.f32 %v202, 2.0
  %v206 = vmul.f32 %v203, 2.0
  %vm207 = vcmp.gt.f32.partialorder %v174, 1.5
  %vm208 = vcmp.gt.f32.partialorder %v175, 1.5
  %vm209 = vcmp.gt.f32.partialorder %v176, 1.5
  %vm210 = vcmp.lt.f32.partialorder %v174, 3.5
  %vm211 = vcmp.lt.f32.partialorder %v175, 3.5
  %vm212 = vcmp.lt.f32.partialorder %v176, 3.5
  %vm213 = vmand %vm207, %vm210
  %vm214 = vmand %vm208, %vm211
  %vm215 = vmand %vm209, %vm212
  %v216 = vsel %vm213, %v134, 0.0
  %v217 = vsel %vm214, %v135, 0.0
  %v218 = vsel %vm215, %v136, 0.0
  %v219 = vmul.f32 %v216, 1.442695
  %v220 = vpow.pop %v219
  %v221 = vmul.f32 %v217, 1.442695
  %v222 = vpow.pop %v221
  %v223 = vmul.f32 %v218, 1.442695
  %v224 = vpow.pop %v223
  %226 = vset.pattern.permute.xlu0 0
  %227 = vperm.xlu0 %226, %v137
  %v228 = vpop.permute.xlu0 %227
  %231 = vset.pattern.permute.xlu0 0
  %232 = vperm.xlu0 %231, %v138
  %v233 = vpop.permute.xlu0 %232
  %236 = vset.pattern.permute.xlu0 0
  %237 = vperm.xlu0 %236, %v139
  %v238 = vpop.permute.xlu0 %237
  %v240 = vmul.f32 %v220, %v228
  %v241 = vmul.f32 %v222, %v233
  %v242 = vmul.f32 %v224, %v238
  %v243 = vmul.f32 %v240, 2.0
  %v244 = vmul.f32 %v241, 2.0
  %v245 = vmul.f32 %v242, 2.0
  %vm246 = vcmp.lt.f32.partialorder %v174, 1.5
  %vm247 = vcmp.lt.f32.partialorder %v175, 1.5
  %vm248 = vcmp.lt.f32.partialorder %v176, 1.5
  %v249 = vsel %vm210, %v243, %v190
  %v250 = vsel %vm211, %v244, %v192
  %v251 = vsel %vm212, %v245, %v194
  %v252 = vsel %vm246, %v204, %v249
  %v253 = vsel %vm247, %v205, %v250
  %v254 = vsel %vm248, %v206, %v251
  %255 = vst [vmem:[%s5] sm:$0xff] %v252
  %256 = vst [vmem:[%s5 + $0x8] sm:$0xff] %v253
  %257 = vst [vmem:[%s5 + $0x10] sm:$0xff] %v254
  // Predicated region
  $region22: #{_lambda_.14} parent=0 // pred_check
    _
  $region23: #{_lambda_.14} parent=0 // pred_check_branch
    %259 = sbr.rel (0) target = $region25
  $region24: #{_lambda_.14} parent=0 // pred_region
    _
  $region25: #{_lambda_.14} parent=0 // pred_fallthru
    _
  // Predicated region
  $region26: #{_lambda_.14} parent=0 // pred_check
    _
  $region27: #{_lambda_.14} parent=0 // pred_check_branch
    %261 = sbr.rel (0) target = $region29
  $region28: #{_lambda_.14} parent=0 // pred_region
    _
  $region29: #{_lambda_.14} parent=0 // pred_fallthru
    _

</llo_original>
